<compile_context>
chip_gen: v5e
topology: v5e:2x2
jax: 0.10.0
libtpu: 0.0.40
codegen_flags: <defaults>
</compile_context>

<pallas_src>
import functools

import jax
import jax.numpy as jnp
import numpy as np
from jax import lax
from jax.experimental import pallas as pl
from jax.experimental.pallas import tpu as pltpu

_VMEM_LIMIT = 48 * 1024 * 1024  # fits v7x's 64 MiB physical VMEM with headroom


def _pick_tile(dim, target, align):
    """Largest block <= target that is the full dim or an `align`-multiple divisor."""
    if dim <= target:
        return dim
    t = (target // align) * align
    while t >= align:
        if dim % t == 0:
            return t
        t -= align
    return dim


# ------------------------- tiled GEMM (+ bias) kernel -------------------------

def _mm_bias_kernel(x_ref, w_ref, b_ref, o_ref, acc_ref):
    k = pl.program_id(2)

    @pl.when(k == 0)
    def _init():
        acc_ref[...] = jnp.zeros_like(acc_ref)

    acc_ref[...] += jnp.dot(x_ref[...], w_ref[...],
                            preferred_element_type=jnp.float32)

    @pl.when(k == pl.num_programs(2) - 1)
    def _finalize():
        o_ref[...] = (acc_ref[...] + b_ref[...]).astype(o_ref.dtype)


def matmul_bias(x, w, b=None, *, compute_dtype=jnp.float32,
                tm=256, tn=256, tk=512):
    """x:(M,K) @ w:(K,N) + b -> (M,N) f32.  `w` is already (K,N) (pre-transposed by
    the caller) so the kernel body never transposes.  MXU inputs are cast to
    `compute_dtype`; accumulation and the bias epilogue stay in float32."""
    M, K = x.shape
    K2, Nout = w.shape
    assert K == K2
    bias = (jnp.zeros((1, Nout), jnp.float32) if b is None
            else b.reshape(1, Nout).astype(jnp.float32))

    bm = _pick_tile(M, tm, 8)
    bn = _pick_tile(Nout, tn, 128)
    bk = _pick_tile(K, tk, 128)
    grid = (M // bm, Nout // bn, K // bk)

    return pl.pallas_call(
        _mm_bias_kernel,
        out_shape=jax.ShapeDtypeStruct((M, Nout), jnp.float32),
        grid=grid,
        in_specs=[
            pl.BlockSpec((bm, bk), lambda i, j, k: (i, k)),
            pl.BlockSpec((bk, bn), lambda i, j, k: (k, j)),
            pl.BlockSpec((1, bn), lambda i, j, k: (0, j)),
        ],
        out_specs=pl.BlockSpec((bm, bn), lambda i, j, k: (i, j)),
        scratch_shapes=[pltpu.VMEM((bm, bn), jnp.float32)],
        compiler_params=pltpu.CompilerParams(
            dimension_semantics=("parallel", "parallel", "arbitrary"),
            vmem_limit_bytes=_VMEM_LIMIT),
    )(x.astype(compute_dtype), w.astype(compute_dtype), bias)


# ------------------------------ MoE gate mixing ------------------------------

def _gate_mix_kernel(gate_ref, f_ref, o_ref, *, nc, n_experts, nj):
    # Reproduces  out[b, m] = sum_e gate[b, e] * expert_flat[b, (e*nc + m) // E]
    # (i.e. torch.stack(dim=-1).view(B, E, N*C) followed by bmm) without ever
    # materializing the E-times repeated array.  Output is stored transposed as
    # (E, NJ): o[r, j] == out[j * E + r]  (lane-dense along j).
    g_row = gate_ref[0]                                            # (1, E)
    row = lax.broadcasted_iota(jnp.int32, (n_experts, nj), 0)
    acc = jnp.zeros((n_experts, nj), jnp.float32)
    for e in range(n_experts):                                     # static unroll
        base = (e * nc) // n_experts
        off = (e * nc) % n_experts
        g_e = g_row[:, e:e + 1]                                    # (1, 1)
        sl0 = f_ref[0, 0, :, base:base + nj].astype(jnp.float32)   # (1, NJ)
        if off == 0:
            acc = acc + g_e * sl0
        else:
            sl1 = f_ref[0, 0, :, base + 1:base + 1 + nj].astype(jnp.float32)
            acc = acc + g_e * jnp.where(row < (n_experts - off), sl0, sl1)
    o_ref[0, 0] = acc


def gate_mix(gate, expert_flat):
    """gate:(B,E) f32, expert_flat:(B,2,N*C) f32 -> (B,2,N*C) f32 mixed output."""
    B, T, NC = expert_flat.shape
    E = gate.shape[1]
    NJ = -(-NC // E)
    need = ((E - 1) * NC) // E + 1 + NJ          # last source element ever read
    NC_pad = ((max(NC, need) + 127) // 128) * 128
    f = jnp.pad(expert_flat, ((0, 0), (0, 0), (0, NC_pad - NC)))
    f = f.reshape(B, T, 1, NC_pad)
    gate3 = gate.reshape(B, 1, E).astype(jnp.float32)

    out = pl.pallas_call(
        functools.partial(_gate_mix_kernel, nc=NC, n_experts=E, nj=NJ),
        out_shape=jax.ShapeDtypeStruct((B, T, E, NJ), jnp.float32),
        grid=(B, T),
        in_specs=[
            pl.BlockSpec((1, 1, E), lambda b, t: (b, 0, 0)),
            pl.BlockSpec((1, 1, 1, NC_pad), lambda b, t: (b, t, 0, 0)),
        ],
        out_specs=pl.BlockSpec((1, 1, E, NJ), lambda b, t: (b, t, 0, 0)),
        compiler_params=pltpu.CompilerParams(
            dimension_semantics=("parallel", "parallel"),
            vmem_limit_bytes=_VMEM_LIMIT),
    )(gate3, f)
    # undo the transposed (E, NJ) layout and drop the padding tail
    return out.transpose(0, 1, 3, 2).reshape(B, T, NJ * E)[:, :, :NC]


# -------------------------------- attention ----------------------------------

def _attention_kernel(q_ref, k_ref, v_ref, o_ref, *, scale, approx_recip):
    q = q_ref[0]        # (hb, N, hd)
    k = k_ref[0, 0]
    v = v_ref[0, 0]
    # contract the last dims directly (no in-kernel transpose), batch over heads
    s = lax.dot_general(q, k, (((2,), (2,)), ((0,), (0,))),
                        preferred_element_type=jnp.float32) * scale      # (hb,N,N)
    m = jnp.max(s, axis=-1, keepdims=True)
    p = jnp.exp(s - m)                                                    # unnormalized
    l = jnp.sum(p, axis=-1, keepdims=True)
    o = lax.dot_general(p.astype(v.dtype), v, (((2,), (1,)), ((0,), (0,))),
                        preferred_element_type=jnp.float32)               # (hb,N,hd)
    # normalize after the PV matmul; reciprocal goes to the EUP slot
    o_ref[0, 0] = (o * pl.reciprocal(l, approx=approx_recip)).astype(o_ref.dtype)


def attention(q, k_all, v_all, scale, *, compute_dtype, heads_per_block=2):
    """q:(B,H,N,hd); k_all/v_all:(2,B,H,N,hd) -> (2,B,H,N,hd) f32.
    Both branches (k/v and k_proj/v_proj) run in one pallas_call; the branch axis is
    the innermost grid axis so each q tile is DMA'd once."""
    B, H, N, hd = q.shape
    hb = heads_per_block if H % heads_per_block == 0 else 1
    approx = compute_dtype != jnp.float32

    q_spec = pl.BlockSpec((1, hb, N, hd), lambda b, h, br: (b, h, 0, 0))
    kv_spec = pl.BlockSpec((1, 1, hb, N, hd), lambda b, h, br: (br, b, h, 0, 0))
    return pl.pallas_call(
        functools.partial(_attention_kernel, scale=scale, approx_recip=approx),
        out_shape=jax.ShapeDtypeStruct((2, B, H, N, hd), jnp.float32),
        grid=(B, H // hb, 2),
        in_specs=[q_spec, kv_spec, kv_spec],
        out_specs=kv_spec,
        compiler_params=pltpu.CompilerParams(
            dimension_semantics=("parallel", "parallel", "arbitrary"),
            vmem_limit_bytes=_VMEM_LIMIT),
    )(q.astype(compute_dtype), k_all.astype(compute_dtype),
      v_all.astype(compute_dtype))


# --------------------------- module forward pass ----------------------------

def moe_masked_lora_attention_forward(params, x, x_proj, num_heads,
                                      apply_lora=False,
                                      compute_dtype=jnp.float32):
    B, N, C = x.shape
    H = num_heads
    hd = C // H
    scale = hd ** (-0.5)

    q_w, k_w, v_w = jnp.split(params["w_qkv"], 3, axis=0)
    if apply_lora:
        k_w = k_w + params["lora_B_k"] @ params["lora_A_k"]
        v_w = v_w + params["lora_B_v"] @ params["lora_A_v"]
    w_qkv_eff = jnp.concatenate([q_w, k_w, v_w], axis=0)          # (3C, C)

    # fused qkv projection (tiled Pallas GEMM; weight pre-transposed -> no in-kernel .T)
    x_flat = x.reshape(B * N, C)
    qkv = matmul_bias(x_flat, w_qkv_eff.T, params["b_qkv"],
                      compute_dtype=compute_dtype)                # (B*N, 3C) f32
    qkv = qkv.reshape(B, N, 3 * C)
    q_bnc, k_bnc, v_bnc = qkv[:, :, :C], qkv[:, :, C:2 * C], qkv[:, :, 2 * C:]

    # MoE router gating: (B, N*C) @ (N*C, E)  -- K-tiled Pallas GEMM
    gate = matmul_bias(k_bnc.reshape(B, N * C), params["router"],
                       compute_dtype=compute_dtype)               # (B, E) f32
    _top_expert_indices = jnp.argmax(gate, axis=1)
    # TODO(synk): reference also prints torch.bincount(top_expert_indices) in training
    # mode (logging side effect only); omitted here.

    # Experts: k- and v-branches fused into a single GEMM.
    # TODO(synk): the `Proj` expert class is not provided in the reference source; the
    # stand-in expert is expert_e(x_proj, W, expert_id) = x_proj @ W.T (identical across e).
    w_kv_t = jnp.concatenate([k_w, v_w], axis=0).T                # (C, 2C)
    expert_kv = matmul_bias(x_proj.reshape(B * N, C), w_kv_t,
                            compute_dtype=compute_dtype)          # (B*N, 2C) f32
    ek = expert_kv[:, :C].reshape(B, N * C)
    ev = expert_kv[:, C:].reshape(B, N * C)

    # gate mixing (stack(dim=-1).view(B,E,N*C) + bmm semantics, no E-times broadcast)
    mixed = gate_mix(gate, jnp.stack([ek, ev], axis=1))           # (B, 2, N*C)
    k_proj_bnc = mixed[:, 0].reshape(B, N, C)
    v_proj_bnc = mixed[:, 1].reshape(B, N, C)

    def to_heads(t):
        return t.reshape(B, N, H, hd).transpose(0, 2, 1, 3)       # (B, H, N, hd)

    q4 = to_heads(q_bnc)
    k_all = jnp.stack([to_heads(k_bnc), to_heads(k_proj_bnc)], axis=0)   # (2,B,H,N,hd)
    v_all = jnp.stack([to_heads(v_bnc), to_heads(v_proj_bnc)], axis=0)

    # both attention branches in one fused pallas_call
    # TODO(synk): attn_mask path not exercised (attn_mask=None, matching the default call).
    o_all = attention(q4, k_all, v_all, scale, compute_dtype=compute_dtype)

    # fused output projection on the concatenated branches
    o_cat = o_all.transpose(0, 1, 3, 2, 4).reshape(2 * B * N, C)
    out = matmul_bias(o_cat, params["w_proj"].T, params["b_proj"],
                      compute_dtype=compute_dtype)                # (2*B*N, C)
    x_out = out[:B * N].reshape(B, N, C)
    x_proj_out = out[B * N:].reshape(B, N, C)
    return x_out, x_proj_out


# ------------------------------ params / ref ---------------------------------

def init_params(key, dim, seq_len, experts_num=10, lora_rank=10):
    ks = jax.random.split(key, 8)

    def w(kk, shape, s=0.02):
        return jax.random.normal(kk, shape, jnp.float32) * s

    return {
        "w_qkv": w(ks[0], (3 * dim, dim)),
        "b_qkv": w(ks[1], (3 * dim,)),
        "w_proj": w(ks[2], (dim, dim)),
        "b_proj": w(ks[3], (dim,)),
        # module hard-codes router of shape (151296, 10) = (197*768, experts);
        # scaled analog here is (seq_len*dim, experts).
        "router": w(ks[4], (seq_len * dim, experts_num)),
        "lora_A_k": w(ks[5], (lora_rank, dim)),
        "lora_B_k": jnp.zeros((dim, lora_rank), jnp.float32),
        "lora_A_v": w(ks[6], (lora_rank, dim)),
        "lora_B_v": jnp.zeros((dim, lora_rank), jnp.float32),
    }


def reference_forward(params, x, x_proj, num_heads):
    """Pure-JAX reference of the same forward semantics (for validation)."""
    B, N, C = x.shape
    H = num_heads
    hd = C // H
    scale = hd ** (-0.5)
    E = params["router"].shape[1]
    q_w, k_w, v_w = jnp.split(params["w_qkv"], 3, axis=0)
    qkv = x @ params["w_qkv"].T + params["b_qkv"]
    qkv = qkv.reshape(B, N, 3, H, hd).transpose(2, 0, 3, 1, 4)
    q, k, v = qkv[0], qkv[1], qkv[2]
    k_bnc = k.transpose(0, 2, 1, 3).reshape(B, N, C)
    v_bnc = v.transpose(0, 2, 1, 3).reshape(B, N, C)
    gate = k_bnc.reshape(B, N * C) @ params["router"]
    ek = x_proj @ k_w.T
    ev = x_proj @ v_w.T

    def mix(o):
        st = jnp.broadcast_to(o[..., None], (B, N, C, E)).reshape(B, E, N * C)
        return jnp.einsum("be,bem->bm", gate, st)

    k_proj = mix(ek).reshape(B, N, H, hd).transpose(0, 2, 1, 3)
    v_proj = mix(ev).reshape(B, N, H, hd).transpose(0, 2, 1, 3)

    def attn(qq, kk, vv):
        s = jnp.einsum("bhnd,bhmd->bhnm", qq, kk) * scale
        p = jax.nn.softmax(s, axis=-1)
        return jnp.einsum("bhnm,bhmd->bhnd", p, vv)

    o1 = attn(q, k, v).transpose(0, 2, 1, 3).reshape(B, N, C)
    o2 = attn(q, k_proj, v_proj).transpose(0, 2, 1, 3).reshape(B, N, C)
    return (o1 @ params["w_proj"].T + params["b_proj"],
            o2 @ params["w_proj"].T + params["b_proj"])


# ----------------------------------- main ------------------------------------

if __name__ == "__main__":
    B, N, C, H = 2, 8, 32, 4   # small analog of the module's (B, 197, 768) / 8 heads

    key = jax.random.PRNGKey(0)
    kx, kxp, kp = jax.random.split(key, 3)
    x = jax.random.normal(kx, (B, N, C), jnp.float32)
    x_proj = jax.random.normal(kxp, (B, N, C), jnp.float32)
    params = init_params(kp, dim=C, seq_len=N, experts_num=10, lora_rank=10)

    ref_out, ref_proj_out = reference_forward(params, x, x_proj, H)

    # float32 path: tight numerical check against the pure-JAX reference.
    fwd_f32 = jax.jit(functools.partial(
        moe_masked_lora_attention_forward, num_heads=H,
        compute_dtype=jnp.float32))
    x_out, x_proj_out = fwd_f32(params, x, x_proj)
    jax.block_until_ready((x_out, x_proj_out))
    assert x_out.shape == (B, N, C) and x_proj_out.shape == (B, N, C)
    np.testing.assert_allclose(np.asarray(x_out), np.asarray(ref_out),
                               rtol=1e-4, atol=1e-4)
    np.testing.assert_allclose(np.asarray(x_proj_out), np.asarray(ref_proj_out),
                               rtol=1e-4, atol=1e-4)

    # bf16 MXU path (f32 accumulation, f32 softmax stats): looser tolerance.
    fwd_bf16 = jax.jit(functools.partial(
        moe_masked_lora_attention_forward, num_heads=H,
        compute_dtype=jnp.bfloat16))
    xb, xpb = fwd_bf16(params, x, x_proj)
    jax.block_until_ready((xb, xpb))
    np.testing.assert_allclose(np.asarray(xb), np.asarray(ref_out),
                               rtol=5e-2, atol=2e-2)
    np.testing.assert_allclose(np.asarray(xpb), np.asarray(ref_proj_out),
                               rtol=5e-2, atol=2e-2)

    print("KERNEL_OK")
</pallas_src>

<mosaic_0001>
module attributes {stable_mosaic.version = 11 : i64} {
  func.func @_mm_bias_kernel(%arg0: i32, %arg1: i32, %arg2: i32, %arg3: memref<16x32xf32, #tpu.memory_space<vmem>>, %arg4: memref<32x96xf32, #tpu.memory_space<vmem>>, %arg5: memref<1x96xf32, #tpu.memory_space<vmem>>, %arg6: memref<16x96xf32, #tpu.memory_space<vmem>>, %arg7: memref<16x96xf32, #tpu.memory_space<vmem>>) attributes {dimension_semantics = [#tpu.dimension_semantics<parallel>, #tpu.dimension_semantics<parallel>, #tpu.dimension_semantics<arbitrary>], iteration_bounds = array<i64: 1, 1, 1>, scalar_prefetch = 0 : i64, scratch_operands = 1 : i64, tpu.core_type = #tpu.core_type<tc>, window_params = [{transform_indices = @transform_0, window_bounds = array<i64: 16, 32>}, {transform_indices = @transform_1, window_bounds = array<i64: 32, 96>}, {transform_indices = @transform_2, window_bounds = array<i64: 1, 96>}, {transform_indices = @transform_3, window_bounds = array<i64: 16, 96>}]} {
    %c0_i32 = arith.constant 0 : i32
    %0 = arith.cmpi eq, %arg2, %c0_i32 : i32
    %1 = arith.extui %0 : i1 to i32
    %c0_i32_0 = arith.constant 0 : i32
    %2 = arith.cmpi ne, %1, %c0_i32_0 : i32
    scf.if %2 {
      %cst_10 = arith.constant 0.000000e+00 : f32
      %12 = vector.broadcast %cst_10 : f32 to vector<16x96xf32>
      %c0_11 = arith.constant 0 : index
      %c0_12 = arith.constant 0 : index
      %13 = vector.load %arg7[%c0_11, %c0_12] : memref<16x96xf32, #tpu.memory_space<vmem>>, vector<16x96xf32>
      tpu.vector_store %arg7[%c0_11, %c0_12], %12 {strides = array<i32>} : memref<16x96xf32, #tpu.memory_space<vmem>>, vector<16x96xf32>,
    } else {
    }
    %c0 = arith.constant 0 : index
    %c0_1 = arith.constant 0 : index
    %3 = vector.load %arg7[%c0, %c0_1] : memref<16x96xf32, #tpu.memory_space<vmem>>, vector<16x96xf32>
    %c0_2 = arith.constant 0 : index
    %c0_3 = arith.constant 0 : index
    %4 = vector.load %arg3[%c0_2, %c0_3] : memref<16x32xf32, #tpu.memory_space<vmem>>, vector<16x32xf32>
    %c0_4 = arith.constant 0 : index
    %c0_5 = arith.constant 0 : index
    %5 = vector.load %arg4[%c0_4, %c0_5] : memref<32x96xf32, #tpu.memory_space<vmem>>, vector<32x96xf32>
    %cst = arith.constant dense<0.000000e+00> : vector<16x96xf32>
    %6 = tpu.matmul %4, %5, %cst {dimension_numbers = #tpu.dot_dimension_numbers<[1], [0], [0], [1], [0, 0, 1, 1], [], []>} : vector<16x32xf32>, vector<32x96xf32>, vector<16x96xf32> -> vector<16x96xf32>
    %7 = arith.addf %3, %6 : vector<16x96xf32>
    %c0_6 = arith.constant 0 : index
    %c0_7 = arith.constant 0 : index
    %8 = vector.load %arg7[%c0_6, %c0_7] : memref<16x96xf32, #tpu.memory_space<vmem>>, vector<16x96xf32>
    tpu.vector_store %arg7[%c0_6, %c0_7], %7 {strides = array<i32>} : memref<16x96xf32, #tpu.memory_space<vmem>>, vector<16x96xf32>,
    %c0_i32_8 = arith.constant 0 : i32
    %9 = arith.cmpi eq, %arg2, %c0_i32_8 : i32
    %10 = arith.extui %9 : i1 to i32
    %c0_i32_9 = arith.constant 0 : i32
    %11 = arith.cmpi ne, %10, %c0_i32_9 : i32
    scf.if %11 {
      %c0_10 = arith.constant 0 : index
      %c0_11 = arith.constant 0 : index
      %12 = vector.load %arg7[%c0_10, %c0_11] : memref<16x96xf32, #tpu.memory_space<vmem>>, vector<16x96xf32>
      %c0_12 = arith.constant 0 : index
      %c0_13 = arith.constant 0 : index
      %13 = vector.load %arg5[%c0_12, %c0_13] : memref<1x96xf32, #tpu.memory_space<vmem>>, vector<1x96xf32>
      %14 = vector.broadcast %13 : vector<1x96xf32> to vector<16x96xf32>
      %15 = arith.addf %12, %14 : vector<16x96xf32>
      %c0_14 = arith.constant 0 : index
      %c0_15 = arith.constant 0 : index
      %16 = vector.load %arg6[%c0_14, %c0_15] : memref<16x96xf32, #tpu.memory_space<vmem>>, vector<16x96xf32>
      tpu.vector_store %arg6[%c0_14, %c0_15], %15 {strides = array<i32>} : memref<16x96xf32, #tpu.memory_space<vmem>>, vector<16x96xf32>,
    } else {
    }
    return
  }
  func.func @transform_0(%arg0: i32, %arg1: i32, %arg2: i32) -> (i32, i32) {
    %c0_i32 = arith.constant 0 : i32
    return %arg0, %arg2 : i32, i32
  }
  func.func @transform_1(%arg0: i32, %arg1: i32, %arg2: i32) -> (i32, i32) {
    %c0_i32 = arith.constant 0 : i32
    return %arg2, %arg1 : i32, i32
  }
  func.func @transform_2(%arg0: i32, %arg1: i32, %arg2: i32) -> (i32, i32) {
    %c0_i32 = arith.constant 0 : i32
    %c0_i32_0 = arith.constant 0 : i32
    return %c0_i32, %arg1 : i32, i32
  }
  func.func @transform_3(%arg0: i32, %arg1: i32, %arg2: i32) -> (i32, i32) {
    %c0_i32 = arith.constant 0 : i32
    return %arg0, %arg1 : i32, i32
  }
}

module attributes {stable_mosaic.version = 11 : i64} {
  func.func @_mm_bias_kernel(%arg0: i32, %arg1: i32, %arg2: i32, %arg3: memref<16x32xf32, #tpu.memory_space<vmem>>, %arg4: memref<32x64xf32, #tpu.memory_space<vmem>>, %arg5: memref<1x64xf32, #tpu.memory_space<vmem>>, %arg6: memref<16x64xf32, #tpu.memory_space<vmem>>, %arg7: memref<16x64xf32, #tpu.memory_space<vmem>>) attributes {dimension_semantics = [#tpu.dimension_semantics<parallel>, #tpu.dimension_semantics<parallel>, #tpu.dimension_semantics<arbitrary>], iteration_bounds = array<i64: 1, 1, 1>, scalar_prefetch = 0 : i64, scratch_operands = 1 : i64, tpu.core_type = #tpu.core_type<tc>, window_params = [{transform_indices = @transform_0, window_bounds = array<i64: 16, 32>}, {transform_indices = @transform_1, window_bounds = array<i64: 32, 64>}, {transform_indices = @transform_2, window_bounds = array<i64: 1, 64>}, {transform_indices = @transform_3, window_bounds = array<i64: 16, 64>}]} {
    %c0_i32 = arith.constant 0 : i32
    %0 = arith.cmpi eq, %arg2, %c0_i32 : i32
    %1 = arith.extui %0 : i1 to i32
    %c0_i32_0 = arith.constant 0 : i32
    %2 = arith.cmpi ne, %1, %c0_i32_0 : i32
    scf.if %2 {
      %cst_10 = arith.constant 0.000000e+00 : f32
      %12 = vector.broadcast %cst_10 : f32 to vector<16x64xf32>
      %c0_11 = arith.constant 0 : index
      %c0_12 = arith.constant 0 : index
      %13 = vector.load %arg7[%c0_11, %c0_12] : memref<16x64xf32, #tpu.memory_space<vmem>>, vector<16x64xf32>
      tpu.vector_store %arg7[%c0_11, %c0_12], %12 {strides = array<i32>} : memref<16x64xf32, #tpu.memory_space<vmem>>, vector<16x64xf32>,
    } else {
    }
    %c0 = arith.constant 0 : index
    %c0_1 = arith.constant 0 : index
    %3 = vector.load %arg7[%c0, %c0_1] : memref<16x64xf32, #tpu.memory_space<vmem>>, vector<16x64xf32>
    %c0_2 = arith.constant 0 : index
    %c0_3 = arith.constant 0 : index
    %4 = vector.load %arg3[%c0_2, %c0_3] : memref<16x32xf32, #tpu.memory_space<vmem>>, vector<16x32xf32>
    %c0_4 = arith.constant 0 : index
    %c0_5 = arith.constant 0 : index
    %5 = vector.load %arg4[%c0_4, %c0_5] : memref<32x64xf32, #tpu.memory_space<vmem>>, vector<32x64xf32>
    %cst = arith.constant dense<0.000000e+00> : vector<16x64xf32>
    %6 = tpu.matmul %4, %5, %cst {dimension_numbers = #tpu.dot_dimension_numbers<[1], [0], [0], [1], [0, 0, 1, 1], [], []>} : vector<16x32xf32>, vector<32x64xf32>, vector<16x64xf32> -> vector<16x64xf32>
    %7 = arith.addf %3, %6 : vector<16x64xf32>
    %c0_6 = arith.constant 0 : index
    %c0_7 = arith.constant 0 : index
    %8 = vector.load %arg7[%c0_6, %c0_7] : memref<16x64xf32, #tpu.memory_space<vmem>>, vector<16x64xf32>
    tpu.vector_store %arg7[%c0_6, %c0_7], %7 {strides = array<i32>} : memref<16x64xf32, #tpu.memory_space<vmem>>, vector<16x64xf32>,
    %c0_i32_8 = arith.constant 0 : i32
    %9 = arith.cmpi eq, %arg2, %c0_i32_8 : i32
    %10 = arith.extui %9 : i1 to i32
    %c0_i32_9 = arith.constant 0 : i32
    %11 = arith.cmpi ne, %10, %c0_i32_9 : i32
    scf.if %11 {
      %c0_10 = arith.constant 0 : index
      %c0_11 = arith.constant 0 : index
      %12 = vector.load %arg7[%c0_10, %c0_11] : memref<16x64xf32, #tpu.memory_space<vmem>>, vector<16x64xf32>
      %c0_12 = arith.constant 0 : index
      %c0_13 = arith.constant 0 : index
      %13 = vector.load %arg5[%c0_12, %c0_13] : memref<1x64xf32, #tpu.memory_space<vmem>>, vector<1x64xf32>
      %14 = vector.broadcast %13 : vector<1x64xf32> to vector<16x64xf32>
      %15 = arith.addf %12, %14 : vector<16x64xf32>
      %c0_14 = arith.constant 0 : index
      %c0_15 = arith.constant 0 : index
      %16 = vector.load %arg6[%c0_14, %c0_15] : memref<16x64xf32, #tpu.memory_space<vmem>>, vector<16x64xf32>
      tpu.vector_store %arg6[%c0_14, %c0_15], %15 {strides = array<i32>} : memref<16x64xf32, #tpu.memory_space<vmem>>, vector<16x64xf32>,
    } else {
    }
    return
  }
  func.func @transform_0(%arg0: i32, %arg1: i32, %arg2: i32) -> (i32, i32) {
    %c0_i32 = arith.constant 0 : i32
    return %arg0, %arg2 : i32, i32
  }
  func.func @transform_1(%arg0: i32, %arg1: i32, %arg2: i32) -> (i32, i32) {
    %c0_i32 = arith.constant 0 : i32
    return %arg2, %arg1 : i32, i32
  }
  func.func @transform_2(%arg0: i32, %arg1: i32, %arg2: i32) -> (i32, i32) {
    %c0_i32 = arith.constant 0 : i32
    %c0_i32_0 = arith.constant 0 : i32
    return %c0_i32, %arg1 : i32, i32
  }
  func.func @transform_3(%arg0: i32, %arg1: i32, %arg2: i32) -> (i32, i32) {
    %c0_i32 = arith.constant 0 : i32
    return %arg0, %arg1 : i32, i32
  }
}

module attributes {stable_mosaic.version = 11 : i64} {
  func.func @_mm_bias_kernel(%arg0: i32, %arg1: i32, %arg2: i32, %arg3: memref<2x256xf32, #tpu.memory_space<vmem>>, %arg4: memref<256x10xf32, #tpu.memory_space<vmem>>, %arg5: memref<1x10xf32, #tpu.memory_space<vmem>>, %arg6: memref<2x10xf32, #tpu.memory_space<vmem>>, %arg7: memref<2x10xf32, #tpu.memory_space<vmem>>) attributes {dimension_semantics = [#tpu.dimension_semantics<parallel>, #tpu.dimension_semantics<parallel>, #tpu.dimension_semantics<arbitrary>], iteration_bounds = array<i64: 1, 1, 1>, scalar_prefetch = 0 : i64, scratch_operands = 1 : i64, tpu.core_type = #tpu.core_type<tc>, window_params = [{transform_indices = @transform_0, window_bounds = array<i64: 2, 256>}, {transform_indices = @transform_1, window_bounds = array<i64: 256, 10>}, {transform_indices = @transform_2, window_bounds = array<i64: 1, 10>}, {transform_indices = @transform_3, window_bounds = array<i64: 2, 10>}]} {
    %c0_i32 = arith.constant 0 : i32
    %0 = arith.cmpi eq, %arg2, %c0_i32 : i32
    %1 = arith.extui %0 : i1 to i32
    %c0_i32_0 = arith.constant 0 : i32
    %2 = arith.cmpi ne, %1, %c0_i32_0 : i32
    scf.if %2 {
      %cst_10 = arith.constant 0.000000e+00 : f32
      %12 = vector.broadcast %cst_10 : f32 to vector<2x10xf32>
      %c0_11 = arith.constant 0 : index
      %c0_12 = arith.constant 0 : index
      %13 = vector.load %arg7[%c0_11, %c0_12] : memref<2x10xf32, #tpu.memory_space<vmem>>, vector<2x10xf32>
      tpu.vector_store %arg7[%c0_11, %c0_12], %12 {strides = array<i32>} : memref<2x10xf32, #tpu.memory_space<vmem>>, vector<2x10xf32>,
    } else {
    }
    %c0 = arith.constant 0 : index
    %c0_1 = arith.constant 0 : index
    %3 = vector.load %arg7[%c0, %c0_1] : memref<2x10xf32, #tpu.memory_space<vmem>>, vector<2x10xf32>
    %c0_2 = arith.constant 0 : index
    %c0_3 = arith.constant 0 : index
    %4 = vector.load %arg3[%c0_2, %c0_3] : memref<2x256xf32, #tpu.memory_space<vmem>>, vector<2x256xf32>
    %c0_4 = arith.constant 0 : index
    %c0_5 = arith.constant 0 : index
    %5 = vector.load %arg4[%c0_4, %c0_5] : memref<256x10xf32, #tpu.memory_space<vmem>>, vector<256x10xf32>
    %cst = arith.constant dense<0.000000e+00> : vector<2x10xf32>
    %6 = tpu.matmul %4, %5, %cst {dimension_numbers = #tpu.dot_dimension_numbers<[1], [0], [0], [1], [0, 0, 1, 1], [], []>} : vector<2x256xf32>, vector<256x10xf32>, vector<2x10xf32> -> vector<2x10xf32>
    %7 = arith.addf %3, %6 : vector<2x10xf32>
    %c0_6 = arith.constant 0 : index
    %c0_7 = arith.constant 0 : index
    %8 = vector.load %arg7[%c0_6, %c0_7] : memref<2x10xf32, #tpu.memory_space<vmem>>, vector<2x10xf32>
    tpu.vector_store %arg7[%c0_6, %c0_7], %7 {strides = array<i32>} : memref<2x10xf32, #tpu.memory_space<vmem>>, vector<2x10xf32>,
    %c0_i32_8 = arith.constant 0 : i32
    %9 = arith.cmpi eq, %arg2, %c0_i32_8 : i32
    %10 = arith.extui %9 : i1 to i32
    %c0_i32_9 = arith.constant 0 : i32
    %11 = arith.cmpi ne, %10, %c0_i32_9 : i32
    scf.if %11 {
      %c0_10 = arith.constant 0 : index
      %c0_11 = arith.constant 0 : index
      %12 = vector.load %arg7[%c0_10, %c0_11] : memref<2x10xf32, #tpu.memory_space<vmem>>, vector<2x10xf32>
      %c0_12 = arith.constant 0 : index
      %c0_13 = arith.constant 0 : index
      %13 = vector.load %arg5[%c0_12, %c0_13] : memref<1x10xf32, #tpu.memory_space<vmem>>, vector<1x10xf32>
      %14 = vector.broadcast %13 : vector<1x10xf32> to vector<2x10xf32>
      %15 = arith.addf %12, %14 : vector<2x10xf32>
      %c0_14 = arith.constant 0 : index
      %c0_15 = arith.constant 0 : index
      %16 = vector.load %arg6[%c0_14, %c0_15] : memref<2x10xf32, #tpu.memory_space<vmem>>, vector<2x10xf32>
      tpu.vector_store %arg6[%c0_14, %c0_15], %15 {strides = array<i32>} : memref<2x10xf32, #tpu.memory_space<vmem>>, vector<2x10xf32>,
    } else {
    }
    return
  }
  func.func @transform_0(%arg0: i32, %arg1: i32, %arg2: i32) -> (i32, i32) {
    %c0_i32 = arith.constant 0 : i32
    return %arg0, %arg2 : i32, i32
  }
  func.func @transform_1(%arg0: i32, %arg1: i32, %arg2: i32) -> (i32, i32) {
    %c0_i32 = arith.constant 0 : i32
    return %arg2, %arg1 : i32, i32
  }
  func.func @transform_2(%arg0: i32, %arg1: i32, %arg2: i32) -> (i32, i32) {
    %c0_i32 = arith.constant 0 : i32
    %c0_i32_0 = arith.constant 0 : i32
    return %c0_i32, %arg1 : i32, i32
  }
  func.func @transform_3(%arg0: i32, %arg1: i32, %arg2: i32) -> (i32, i32) {
    %c0_i32 = arith.constant 0 : i32
    return %arg0, %arg1 : i32, i32
  }
}

module attributes {stable_mosaic.version = 11 : i64} {
  func.func @_gate_mix_kernel(%arg0: i32, %arg1: i32, %arg2: memref<1x1x10xf32, #tpu.memory_space<vmem>>, %arg3: memref<1x1x1x384xf32, #tpu.memory_space<vmem>>, %arg4: memref<1x1x10x26xf32, #tpu.memory_space<vmem>>) attributes {dimension_semantics = [#tpu.dimension_semantics<parallel>, #tpu.dimension_semantics<parallel>], iteration_bounds = array<i64: 2, 2>, scalar_prefetch = 0 : i64, scratch_operands = 0 : i64, tpu.core_type = #tpu.core_type<tc>, window_params = [{transform_indices = @transform_0, window_bounds = array<i64: 1, 1, 10>}, {transform_indices = @transform_1, window_bounds = array<i64: 1, 1, 1, 384>}, {transform_indices = @transform_2, window_bounds = array<i64: 1, 1, 10, 26>}]} {
    %c0 = arith.constant 0 : index
    %c0_0 = arith.constant 0 : index
    %c0_1 = arith.constant 0 : index
    %0 = vector.load %arg2[%c0, %c0_0, %c0_1] : memref<1x1x10xf32, #tpu.memory_space<vmem>>, vector<1x1x10xf32>
    %1 = vector.shape_cast %0 : vector<1x1x10xf32> to vector<1x10xf32>
    %2 = tpu.iota {dimensions = array<i32: 0>} : vector<10x26xi32>
    %cst = arith.constant 0.000000e+00 : f32
    %3 = vector.broadcast %cst : f32 to vector<10x26xf32>
    %4 = vector.extract_strided_slice %1 {offsets = [0, 0], sizes = [1, 1], strides = [1, 1]} : vector<1x10xf32> to vector<1x1xf32>
    %c0_2 = arith.constant 0 : index
    %c0_3 = arith.constant 0 : index
    %c0_4 = arith.constant 0 : index
    %c0_5 = arith.constant 0 : index
    %5 = vector.load %arg3[%c0_2, %c0_3, %c0_4, %c0_5] : memref<1x1x1x384xf32, #tpu.memory_space<vmem>>, vector<1x1x1x26xf32>
    %6 = vector.shape_cast %5 : vector<1x1x1x26xf32> to vector<1x26xf32>
    %7 = vector.broadcast %4 : vector<1x1xf32> to vector<1x26xf32>
    %8 = arith.mulf %7, %6 : vector<1x26xf32>
    %9 = vector.broadcast %8 : vector<1x26xf32> to vector<10x26xf32>
    %10 = arith.addf %3, %9 : vector<10x26xf32>
    %11 = vector.extract_strided_slice %1 {offsets = [0, 1], sizes = [1, 1], strides = [1, 1]} : vector<1x10xf32> to vector<1x1xf32>
    %c0_6 = arith.constant 0 : index
    %c0_7 = arith.constant 0 : index
    %c0_8 = arith.constant 0 : index
    %c25 = arith.constant 25 : index
    %12 = vector.load %arg3[%c0_6, %c0_7, %c0_8, %c25] : memref<1x1x1x384xf32, #tpu.memory_space<vmem>>, vector<1x1x1x26xf32>
    %13 = vector.shape_cast %12 : vector<1x1x1x26xf32> to vector<1x26xf32>
    %c0_9 = arith.constant 0 : index
    %c0_10 = arith.constant 0 : index
    %c0_11 = arith.constant 0 : index
    %c26 = arith.constant 26 : index
    %14 = vector.load %arg3[%c0_9, %c0_10, %c0_11, %c26] : memref<1x1x1x384xf32, #tpu.memory_space<vmem>>, vector<1x1x1x26xf32>
    %15 = vector.shape_cast %14 : vector<1x1x1x26xf32> to vector<1x26xf32>
    %c4_i32 = arith.constant 4 : i32
    %16 = vector.broadcast %c4_i32 : i32 to vector<10x26xi32>
    %17 = arith.cmpi slt, %2, %16 : vector<10x26xi32>
    %18 = vector.shape_cast %13 : vector<1x26xf32> to vector<1x26xf32>
    %19 = vector.broadcast %18 : vector<1x26xf32> to vector<10x26xf32>
    %20 = vector.shape_cast %15 : vector<1x26xf32> to vector<1x26xf32>
    %21 = vector.broadcast %20 : vector<1x26xf32> to vector<10x26xf32>
    %22 = arith.select %17, %19, %21 : vector<10x26xi1>, vector<10x26xf32>
    %23 = vector.broadcast %11 : vector<1x1xf32> to vector<10x26xf32>
    %24 = arith.mulf %23, %22 : vector<10x26xf32>
    %25 = arith.addf %10, %24 : vector<10x26xf32>
    %26 = vector.extract_strided_slice %1 {offsets = [0, 2], sizes = [1, 1], strides = [1, 1]} : vector<1x10xf32> to vector<1x1xf32>
    %c0_12 = arith.constant 0 : index
    %c0_13 = arith.constant 0 : index
    %c0_14 = arith.constant 0 : index
    %c51 = arith.constant 51 : index
    %27 = vector.load %arg3[%c0_12, %c0_13, %c0_14, %c51] : memref<1x1x1x384xf32, #tpu.memory_space<vmem>>, vector<1x1x1x26xf32>
    %28 = vector.shape_cast %27 : vector<1x1x1x26xf32> to vector<1x26xf32>
    %c0_15 = arith.constant 0 : index
    %c0_16 = arith.constant 0 : index
    %c0_17 = arith.constant 0 : index
    %c52 = arith.constant 52 : index
    %29 = vector.load %arg3[%c0_15, %c0_16, %c0_17, %c52] : memref<1x1x1x384xf32, #tpu.memory_space<vmem>>, vector<1x1x1x26xf32>
    %30 = vector.shape_cast %29 : vector<1x1x1x26xf32> to vector<1x26xf32>
    %c8_i32 = arith.constant 8 : i32
    %31 = vector.broadcast %c8_i32 : i32 to vector<10x26xi32>
    %32 = arith.cmpi slt, %2, %31 : vector<10x26xi32>
    %33 = vector.shape_cast %28 : vector<1x26xf32> to vector<1x26xf32>
    %34 = vector.broadcast %33 : vector<1x26xf32> to vector<10x26xf32>
    %35 = vector.shape_cast %30 : vector<1x26xf32> to vector<1x26xf32>
    %36 = vector.broadcast %35 : vector<1x26xf32> to vector<10x26xf32>
    %37 = arith.select %32, %34, %36 : vector<10x26xi1>, vector<10x26xf32>
    %38 = vector.broadcast %26 : vector<1x1xf32> to vector<10x26xf32>
    %39 = arith.mulf %38, %37 : vector<10x26xf32>
    %40 = arith.addf %25, %39 : vector<10x26xf32>
    %41 = vector.extract_strided_slice %1 {offsets = [0, 3], sizes = [1, 1], strides = [1, 1]} : vector<1x10xf32> to vector<1x1xf32>
    %c0_18 = arith.constant 0 : index
    %c0_19 = arith.constant 0 : index
    %c0_20 = arith.constant 0 : index
    %c76 = arith.constant 76 : index
    %42 = vector.load %arg3[%c0_18, %c0_19, %c0_20, %c76] : memref<1x1x1x384xf32, #tpu.memory_space<vmem>>, vector<1x1x1x26xf32>
    %43 = vector.shape_cast %42 : vector<1x1x1x26xf32> to vector<1x26xf32>
    %c0_21 = arith.constant 0 : index
    %c0_22 = arith.constant 0 : index
    %c0_23 = arith.constant 0 : index
    %c77 = arith.constant 77 : index
    %44 = vector.load %arg3[%c0_21, %c0_22, %c0_23, %c77] : memref<1x1x1x384xf32, #tpu.memory_space<vmem>>, vector<1x1x1x26xf32>
    %45 = vector.shape_cast %44 : vector<1x1x1x26xf32> to vector<1x26xf32>
    %c2_i32 = arith.constant 2 : i32
    %46 = vector.broadcast %c2_i32 : i32 to vector<10x26xi32>
    %47 = arith.cmpi slt, %2, %46 : vector<10x26xi32>
    %48 = vector.shape_cast %43 : vector<1x26xf32> to vector<1x26xf32>
    %49 = vector.broadcast %48 : vector<1x26xf32> to vector<10x26xf32>
    %50 = vector.shape_cast %45 : vector<1x26xf32> to vector<1x26xf32>
    %51 = vector.broadcast %50 : vector<1x26xf32> to vector<10x26xf32>
    %52 = arith.select %47, %49, %51 : vector<10x26xi1>, vector<10x26xf32>
    %53 = vector.broadcast %41 : vector<1x1xf32> to vector<10x26xf32>
    %54 = arith.mulf %53, %52 : vector<10x26xf32>
    %55 = arith.addf %40, %54 : vector<10x26xf32>
    %56 = vector.extract_strided_slice %1 {offsets = [0, 4], sizes = [1, 1], strides = [1, 1]} : vector<1x10xf32> to vector<1x1xf32>
    %c0_24 = arith.constant 0 : index
    %c0_25 = arith.constant 0 : index
    %c0_26 = arith.constant 0 : index
    %c102 = arith.constant 102 : index
    %57 = vector.load %arg3[%c0_24, %c0_25, %c0_26, %c102] : memref<1x1x1x384xf32, #tpu.memory_space<vmem>>, vector<1x1x1x26xf32>
    %58 = vector.shape_cast %57 : vector<1x1x1x26xf32> to vector<1x26xf32>
    %c0_27 = arith.constant 0 : index
    %c0_28 = arith.constant 0 : index
    %c0_29 = arith.constant 0 : index
    %c103 = arith.constant 103 : index
    %59 = vector.load %arg3[%c0_27, %c0_28, %c0_29, %c103] : memref<1x1x1x384xf32, #tpu.memory_space<vmem>>, vector<1x1x1x26xf32>
    %60 = vector.shape_cast %59 : vector<1x1x1x26xf32> to vector<1x26xf32>
    %c6_i32 = arith.constant 6 : i32
    %61 = vector.broadcast %c6_i32 : i32 to vector<10x26xi32>
    %62 = arith.cmpi slt, %2, %61 : vector<10x26xi32>
    %63 = vector.shape_cast %58 : vector<1x26xf32> to vector<1x26xf32>
    %64 = vector.broadcast %63 : vector<1x26xf32> to vector<10x26xf32>
    %65 = vector.shape_cast %60 : vector<1x26xf32> to vector<1x26xf32>
    %66 = vector.broadcast %65 : vector<1x26xf32> to vector<10x26xf32>
    %67 = arith.select %62, %64, %66 : vector<10x26xi1>, vector<10x26xf32>
    %68 = vector.broadcast %56 : vector<1x1xf32> to vector<10x26xf32>
    %69 = arith.mulf %68, %67 : vector<10x26xf32>
    %70 = arith.addf %55, %69 : vector<10x26xf32>
    %71 = vector.extract_strided_slice %1 {offsets = [0, 5], sizes = [1, 1], strides = [1, 1]} : vector<1x10xf32> to vector<1x1xf32>
    %c0_30 = arith.constant 0 : index
    %c0_31 = arith.constant 0 : index
    %c0_32 = arith.constant 0 : index
    %c128 = arith.constant 128 : index
    %72 = vector.load %arg3[%c0_30, %c0_31, %c0_32, %c128] : memref<1x1x1x384xf32, #tpu.memory_space<vmem>>, vector<1x1x1x26xf32>
    %73 = vector.shape_cast %72 : vector<1x1x1x26xf32> to vector<1x26xf32>
    %74 = vector.broadcast %71 : vector<1x1xf32> to vector<1x26xf32>
    %75 = arith.mulf %74, %73 : vector<1x26xf32>
    %76 = vector.broadcast %75 : vector<1x26xf32> to vector<10x26xf32>
    %77 = arith.addf %70, %76 : vector<10x26xf32>
    %78 = vector.extract_strided_slice %1 {offsets = [0, 6], sizes = [1, 1], strides = [1, 1]} : vector<1x10xf32> to vector<1x1xf32>
    %c0_33 = arith.constant 0 : index
    %c0_34 = arith.constant 0 : index
    %c0_35 = arith.constant 0 : index
    %c153 = arith.constant 153 : index
    %79 = vector.load %arg3[%c0_33, %c0_34, %c0_35, %c153] : memref<1x1x1x384xf32, #tpu.memory_space<vmem>>, vector<1x1x1x26xf32>
    %80 = vector.shape_cast %79 : vector<1x1x1x26xf32> to vector<1x26xf32>
    %c0_36 = arith.constant 0 : index
    %c0_37 = arith.constant 0 : index
    %c0_38 = arith.constant 0 : index
    %c154 = arith.constant 154 : index
    %81 = vector.load %arg3[%c0_36, %c0_37, %c0_38, %c154] : memref<1x1x1x384xf32, #tpu.memory_space<vmem>>, vector<1x1x1x26xf32>
    %82 = vector.shape_cast %81 : vector<1x1x1x26xf32> to vector<1x26xf32>
    %c4_i32_39 = arith.constant 4 : i32
    %83 = vector.broadcast %c4_i32_39 : i32 to vector<10x26xi32>
    %84 = arith.cmpi slt, %2, %83 : vector<10x26xi32>
    %85 = vector.shape_cast %80 : vector<1x26xf32> to vector<1x26xf32>
    %86 = vector.broadcast %85 : vector<1x26xf32> to vector<10x26xf32>
    %87 = vector.shape_cast %82 : vector<1x26xf32> to vector<1x26xf32>
    %88 = vector.broadcast %87 : vector<1x26xf32> to vector<10x26xf32>
    %89 = arith.select %84, %86, %88 : vector<10x26xi1>, vector<10x26xf32>
    %90 = vector.broadcast %78 : vector<1x1xf32> to vector<10x26xf32>
    %91 = arith.mulf %90, %89 : vector<10x26xf32>
    %92 = arith.addf %77, %91 : vector<10x26xf32>
    %93 = vector.extract_strided_slice %1 {offsets = [0, 7], sizes = [1, 1], strides = [1, 1]} : vector<1x10xf32> to vector<1x1xf32>
    %c0_40 = arith.constant 0 : index
    %c0_41 = arith.constant 0 : index
    %c0_42 = arith.constant 0 : index
    %c179 = arith.constant 179 : index
    %94 = vector.load %arg3[%c0_40, %c0_41, %c0_42, %c179] : memref<1x1x1x384xf32, #tpu.memory_space<vmem>>, vector<1x1x1x26xf32>
    %95 = vector.shape_cast %94 : vector<1x1x1x26xf32> to vector<1x26xf32>
    %c0_43 = arith.constant 0 : index
    %c0_44 = arith.constant 0 : index
    %c0_45 = arith.constant 0 : index
    %c180 = arith.constant 180 : index
    %96 = vector.load %arg3[%c0_43, %c0_44, %c0_45, %c180] : memref<1x1x1x384xf32, #tpu.memory_space<vmem>>, vector<1x1x1x26xf32>
    %97 = vector.shape_cast %96 : vector<1x1x1x26xf32> to vector<1x26xf32>
    %c8_i32_46 = arith.constant 8 : i32
    %98 = vector.broadcast %c8_i32_46 : i32 to vector<10x26xi32>
    %99 = arith.cmpi slt, %2, %98 : vector<10x26xi32>
    %100 = vector.shape_cast %95 : vector<1x26xf32> to vector<1x26xf32>
    %101 = vector.broadcast %100 : vector<1x26xf32> to vector<10x26xf32>
    %102 = vector.shape_cast %97 : vector<1x26xf32> to vector<1x26xf32>
    %103 = vector.broadcast %102 : vector<1x26xf32> to vector<10x26xf32>
    %104 = arith.select %99, %101, %103 : vector<10x26xi1>, vector<10x26xf32>
    %105 = vector.broadcast %93 : vector<1x1xf32> to vector<10x26xf32>
    %106 = arith.mulf %105, %104 : vector<10x26xf32>
    %107 = arith.addf %92, %106 : vector<10x26xf32>
    %108 = vector.extract_strided_slice %1 {offsets = [0, 8], sizes = [1, 1], strides = [1, 1]} : vector<1x10xf32> to vector<1x1xf32>
    %c0_47 = arith.constant 0 : index
    %c0_48 = arith.constant 0 : index
    %c0_49 = arith.constant 0 : index
    %c204 = arith.constant 204 : index
    %109 = vector.load %arg3[%c0_47, %c0_48, %c0_49, %c204] : memref<1x1x1x384xf32, #tpu.memory_space<vmem>>, vector<1x1x1x26xf32>
    %110 = vector.shape_cast %109 : vector<1x1x1x26xf32> to vector<1x26xf32>
    %c0_50 = arith.constant 0 : index
    %c0_51 = arith.constant 0 : index
    %c0_52 = arith.constant 0 : index
    %c205 = arith.constant 205 : index
    %111 = vector.load %arg3[%c0_50, %c0_51, %c0_52, %c205] : memref<1x1x1x384xf32, #tpu.memory_space<vmem>>, vector<1x1x1x26xf32>
    %112 = vector.shape_cast %111 : vector<1x1x1x26xf32> to vector<1x26xf32>
    %c2_i32_53 = arith.constant 2 : i32
    %113 = vector.broadcast %c2_i32_53 : i32 to vector<10x26xi32>
    %114 = arith.cmpi slt, %2, %113 : vector<10x26xi32>
    %115 = vector.shape_cast %110 : vector<1x26xf32> to vector<1x26xf32>
    %116 = vector.broadcast %115 : vector<1x26xf32> to vector<10x26xf32>
    %117 = vector.shape_cast %112 : vector<1x26xf32> to vector<1x26xf32>
    %118 = vector.broadcast %117 : vector<1x26xf32> to vector<10x26xf32>
    %119 = arith.select %114, %116, %118 : vector<10x26xi1>, vector<10x26xf32>
    %120 = vector.broadcast %108 : vector<1x1xf32> to vector<10x26xf32>
    %121 = arith.mulf %120, %119 : vector<10x26xf32>
    %122 = arith.addf %107, %121 : vector<10x26xf32>
    %123 = vector.extract_strided_slice %1 {offsets = [0, 9], sizes = [1, 1], strides = [1, 1]} : vector<1x10xf32> to vector<1x1xf32>
    %c0_54 = arith.constant 0 : index
    %c0_55 = arith.constant 0 : index
    %c0_56 = arith.constant 0 : index
    %c230 = arith.constant 230 : index
    %124 = vector.load %arg3[%c0_54, %c0_55, %c0_56, %c230] : memref<1x1x1x384xf32, #tpu.memory_space<vmem>>, vector<1x1x1x26xf32>
    %125 = vector.shape_cast %124 : vector<1x1x1x26xf32> to vector<1x26xf32>
    %c0_57 = arith.constant 0 : index
    %c0_58 = arith.constant 0 : index
    %c0_59 = arith.constant 0 : index
    %c231 = arith.constant 231 : index
    %126 = vector.load %arg3[%c0_57, %c0_58, %c0_59, %c231] : memref<1x1x1x384xf32, #tpu.memory_space<vmem>>, vector<1x1x1x26xf32>
    %127 = vector.shape_cast %126 : vector<1x1x1x26xf32> to vector<1x26xf32>
    %c6_i32_60 = arith.constant 6 : i32
    %128 = vector.broadcast %c6_i32_60 : i32 to vector<10x26xi32>
    %129 = arith.cmpi slt, %2, %128 : vector<10x26xi32>
    %130 = vector.shape_cast %125 : vector<1x26xf32> to vector<1x26xf32>
    %131 = vector.broadcast %130 : vector<1x26xf32> to vector<10x26xf32>
    %132 = vector.shape_cast %127 : vector<1x26xf32> to vector<1x26xf32>
    %133 = vector.broadcast %132 : vector<1x26xf32> to vector<10x26xf32>
    %134 = arith.select %129, %131, %133 : vector<10x26xi1>, vector<10x26xf32>
    %135 = vector.broadcast %123 : vector<1x1xf32> to vector<10x26xf32>
    %136 = arith.mulf %135, %134 : vector<10x26xf32>
    %137 = arith.addf %122, %136 : vector<10x26xf32>
    %c0_61 = arith.constant 0 : index
    %c0_62 = arith.constant 0 : index
    %c0_63 = arith.constant 0 : index
    %c0_64 = arith.constant 0 : index
    %138 = vector.load %arg4[%c0_61, %c0_62, %c0_63, %c0_64] : memref<1x1x10x26xf32, #tpu.memory_space<vmem>>, vector<1x1x10x26xf32>
    %139 = vector.shape_cast %138 : vector<1x1x10x26xf32> to vector<10x26xf32>
    %140 = vector.shape_cast %137 : vector<10x26xf32> to vector<1x1x10x26xf32>
    tpu.vector_store %arg4[%c0_61, %c0_62, %c0_63, %c0_64], %140 {strides = array<i32>} : memref<1x1x10x26xf32, #tpu.memory_space<vmem>>, vector<1x1x10x26xf32>,
    return
  }
  func.func @transform_0(%arg0: i32, %arg1: i32) -> (i32, i32, i32) {
    %c0_i32 = arith.constant 0 : i32
    %c0_i32_0 = arith.constant 0 : i32
    %c0_i32_1 = arith.constant 0 : i32
    return %arg0, %c0_i32, %c0_i32_0 : i32, i32, i32
  }
  func.func @transform_1(%arg0: i32, %arg1: i32) -> (i32, i32, i32, i32) {
    %c0_i32 = arith.constant 0 : i32
    %c0_i32_0 = arith.constant 0 : i32
    %c0_i32_1 = arith.constant 0 : i32
    return %arg0, %arg1, %c0_i32, %c0_i32_0 : i32, i32, i32, i32
  }
  func.func @transform_2(%arg0: i32, %arg1: i32) -> (i32, i32, i32, i32) {
    %c0_i32 = arith.constant 0 : i32
    %c0_i32_0 = arith.constant 0 : i32
    %c0_i32_1 = arith.constant 0 : i32
    return %arg0, %arg1, %c0_i32, %c0_i32_0 : i32, i32, i32, i32
  }
}

module attributes {stable_mosaic.version = 11 : i64} {
  func.func @_attention_kernel(%arg0: i32, %arg1: i32, %arg2: i32, %arg3: memref<1x2x8x8xf32, #tpu.memory_space<vmem>>, %arg4: memref<1x1x2x8x8xf32, #tpu.memory_space<vmem>>, %arg5: memref<1x1x2x8x8xf32, #tpu.memory_space<vmem>>, %arg6: memref<1x1x2x8x8xf32, #tpu.memory_space<vmem>>) attributes {dimension_semantics = [#tpu.dimension_semantics<parallel>, #tpu.dimension_semantics<parallel>, #tpu.dimension_semantics<arbitrary>], iteration_bounds = array<i64: 2, 2, 2>, scalar_prefetch = 0 : i64, scratch_operands = 0 : i64, tpu.core_type = #tpu.core_type<tc>, window_params = [{transform_indices = @transform_0, window_bounds = array<i64: 1, 2, 8, 8>}, {transform_indices = @transform_1, window_bounds = array<i64: 1, 1, 2, 8, 8>}, {transform_indices = @transform_2, window_bounds = array<i64: 1, 1, 2, 8, 8>}, {transform_indices = @transform_3, window_bounds = array<i64: 1, 1, 2, 8, 8>}]} {
    %c0 = arith.constant 0 : index
    %c0_0 = arith.constant 0 : index
    %c0_1 = arith.constant 0 : index
    %c0_2 = arith.constant 0 : index
    %0 = vector.load %arg3[%c0, %c0_0, %c0_1, %c0_2] : memref<1x2x8x8xf32, #tpu.memory_space<vmem>>, vector<1x2x8x8xf32>
    %1 = vector.shape_cast %0 : vector<1x2x8x8xf32> to vector<2x8x8xf32>
    %c0_3 = arith.constant 0 : index
    %c0_4 = arith.constant 0 : index
    %c0_5 = arith.constant 0 : index
    %c0_6 = arith.constant 0 : index
    %c0_7 = arith.constant 0 : index
    %2 = vector.load %arg4[%c0_3, %c0_4, %c0_5, %c0_6, %c0_7] : memref<1x1x2x8x8xf32, #tpu.memory_space<vmem>>, vector<1x1x2x8x8xf32>
    %3 = vector.shape_cast %2 : vector<1x1x2x8x8xf32> to vector<2x8x8xf32>
    %c0_8 = arith.constant 0 : index
    %c0_9 = arith.constant 0 : index
    %c0_10 = arith.constant 0 : index
    %c0_11 = arith.constant 0 : index
    %c0_12 = arith.constant 0 : index
    %4 = vector.load %arg5[%c0_8, %c0_9, %c0_10, %c0_11, %c0_12] : memref<1x1x2x8x8xf32, #tpu.memory_space<vmem>>, vector<1x1x2x8x8xf32>
    %5 = vector.shape_cast %4 : vector<1x1x2x8x8xf32> to vector<2x8x8xf32>
    %cst = arith.constant dense<0.000000e+00> : vector<2x8x8xf32>
    %6 = tpu.matmul %1, %3, %cst {dimension_numbers = #tpu.dot_dimension_numbers<[2], [2], [1], [1], [0, 0, 0, 1, 1, 1], [0], [0]>} : vector<2x8x8xf32>, vector<2x8x8xf32>, vector<2x8x8xf32> -> vector<2x8x8xf32>
    %cst_13 = arith.constant 0.353553385 : f32
    %7 = vector.broadcast %cst_13 : f32 to vector<2x8x8xf32>
    %8 = arith.mulf %6, %7 : vector<2x8x8xf32>
    %cst_14 = arith.constant dense<0xFF800000> : vector<2x8xf32>
    %9 = vector.multi_reduction <maximumf>, %8, %cst_14 [2] : vector<2x8x8xf32> to vector<2x8xf32>
    %10 = vector.shape_cast %9 : vector<2x8xf32> to vector<2x8x1xf32>
    %11 = vector.broadcast %10 : vector<2x8x1xf32> to vector<2x8x8xf32>
    %12 = arith.subf %8, %11 : vector<2x8x8xf32>
    %13 = math.exp %12 : vector<2x8x8xf32>
    %cst_15 = arith.constant dense<0.000000e+00> : vector<2x8xf32>
    %14 = vector.multi_reduction <add>, %13, %cst_15 [2] : vector<2x8x8xf32> to vector<2x8xf32>
    %15 = vector.shape_cast %14 : vector<2x8xf32> to vector<2x8x1xf32>
    %cst_16 = arith.constant dense<0.000000e+00> : vector<2x8x8xf32>
    %16 = tpu.matmul %13, %5, %cst_16 {dimension_numbers = #tpu.dot_dimension_numbers<[2], [1], [1], [2], [0, 0, 0, 1, 1, 2], [0], [0]>} : vector<2x8x8xf32>, vector<2x8x8xf32>, vector<2x8x8xf32> -> vector<2x8x8xf32>
    %17 = tpu.reciprocal %15 : vector<2x8x1xf32> -> vector<2x8x1xf32>
    %18 = vector.broadcast %17 : vector<2x8x1xf32> to vector<2x8x8xf32>
    %19 = arith.mulf %16, %18 : vector<2x8x8xf32>
    %c0_17 = arith.constant 0 : index
    %c0_18 = arith.constant 0 : index
    %c0_19 = arith.constant 0 : index
    %c0_20 = arith.constant 0 : index
    %c0_21 = arith.constant 0 : index
    %20 = vector.load %arg6[%c0_17, %c0_18, %c0_19, %c0_20, %c0_21] : memref<1x1x2x8x8xf32, #tpu.memory_space<vmem>>, vector<1x1x2x8x8xf32>
    %21 = vector.shape_cast %20 : vector<1x1x2x8x8xf32> to vector<2x8x8xf32>
    %22 = vector.shape_cast %19 : vector<2x8x8xf32> to vector<1x1x2x8x8xf32>
    tpu.vector_store %arg6[%c0_17, %c0_18, %c0_19, %c0_20, %c0_21], %22 {strides = array<i32>} : memref<1x1x2x8x8xf32, #tpu.memory_space<vmem>>, vector<1x1x2x8x8xf32>,
    return
  }
  func.func @transform_0(%arg0: i32, %arg1: i32, %arg2: i32) -> (i32, i32, i32, i32) {
    %c0_i32 = arith.constant 0 : i32
    %c0_i32_0 = arith.constant 0 : i32
    %c0_i32_1 = arith.constant 0 : i32
    return %arg0, %arg1, %c0_i32, %c0_i32_0 : i32, i32, i32, i32
  }
  func.func @transform_1(%arg0: i32, %arg1: i32, %arg2: i32) -> (i32, i32, i32, i32, i32) {
    %c0_i32 = arith.constant 0 : i32
    %c0_i32_0 = arith.constant 0 : i32
    %c0_i32_1 = arith.constant 0 : i32
    return %arg2, %arg0, %arg1, %c0_i32, %c0_i32_0 : i32, i32, i32, i32, i32
  }
  func.func @transform_2(%arg0: i32, %arg1: i32, %arg2: i32) -> (i32, i32, i32, i32, i32) {
    %c0_i32 = arith.constant 0 : i32
    %c0_i32_0 = arith.constant 0 : i32
    %c0_i32_1 = arith.constant 0 : i32
    return %arg2, %arg0, %arg1, %c0_i32, %c0_i32_0 : i32, i32, i32, i32, i32
  }
  func.func @transform_3(%arg0: i32, %arg1: i32, %arg2: i32) -> (i32, i32, i32, i32, i32) {
    %c0_i32 = arith.constant 0 : i32
    %c0_i32_0 = arith.constant 0 : i32
    %c0_i32_1 = arith.constant 0 : i32
    return %arg2, %arg0, %arg1, %c0_i32, %c0_i32_0 : i32, i32, i32, i32, i32
  }
}

module attributes {stable_mosaic.version = 11 : i64} {
  func.func @_mm_bias_kernel(%arg0: i32, %arg1: i32, %arg2: i32, %arg3: memref<32x32xf32, #tpu.memory_space<vmem>>, %arg4: memref<32x32xf32, #tpu.memory_space<vmem>>, %arg5: memref<1x32xf32, #tpu.memory_space<vmem>>, %arg6: memref<32x32xf32, #tpu.memory_space<vmem>>, %arg7: memref<32x32xf32, #tpu.memory_space<vmem>>) attributes {dimension_semantics = [#tpu.dimension_semantics<parallel>, #tpu.dimension_semantics<parallel>, #tpu.dimension_semantics<arbitrary>], iteration_bounds = array<i64: 1, 1, 1>, scalar_prefetch = 0 : i64, scratch_operands = 1 : i64, tpu.core_type = #tpu.core_type<tc>, window_params = [{transform_indices = @transform_0, window_bounds = array<i64: 32, 32>}, {transform_indices = @transform_1, window_bounds = array<i64: 32, 32>}, {transform_indices = @transform_2, window_bounds = array<i64: 1, 32>}, {transform_indices = @transform_3, window_bounds = array<i64: 32, 32>}]} {
    %c0_i32 = arith.constant 0 : i32
    %0 = arith.cmpi eq, %arg2, %c0_i32 : i32
    %1 = arith.extui %0 : i1 to i32
    %c0_i32_0 = arith.constant 0 : i32
    %2 = arith.cmpi ne, %1, %c0_i32_0 : i32
    scf.if %2 {
      %cst_10 = arith.constant 0.000000e+00 : f32
      %12 = vector.broadcast %cst_10 : f32 to vector<32x32xf32>
      %c0_11 = arith.constant 0 : index
      %c0_12 = arith.constant 0 : index
      %13 = vector.load %arg7[%c0_11, %c0_12] : memref<32x32xf32, #tpu.memory_space<vmem>>, vector<32x32xf32>
      tpu.vector_store %arg7[%c0_11, %c0_12], %12 {strides = array<i32>} : memref<32x32xf32, #tpu.memory_space<vmem>>, vector<32x32xf32>,
    } else {
    }
    %c0 = arith.constant 0 : index
    %c0_1 = arith.constant 0 : index
    %3 = vector.load %arg7[%c0, %c0_1] : memref<32x32xf32, #tpu.memory_space<vmem>>, vector<32x32xf32>
    %c0_2 = arith.constant 0 : index
    %c0_3 = arith.constant 0 : index
    %4 = vector.load %arg3[%c0_2, %c0_3] : memref<32x32xf32, #tpu.memory_space<vmem>>, vector<32x32xf32>
    %c0_4 = arith.constant 0 : index
    %c0_5 = arith.constant 0 : index
    %5 = vector.load %arg4[%c0_4, %c0_5] : memref<32x32xf32, #tpu.memory_space<vmem>>, vector<32x32xf32>
    %cst = arith.constant dense<0.000000e+00> : vector<32x32xf32>
    %6 = tpu.matmul %4, %5, %cst {dimension_numbers = #tpu.dot_dimension_numbers<[1], [0], [0], [1], [0, 0, 1, 1], [], []>} : vector<32x32xf32>, vector<32x32xf32>, vector<32x32xf32> -> vector<32x32xf32>
    %7 = arith.addf %3, %6 : vector<32x32xf32>
    %c0_6 = arith.constant 0 : index
    %c0_7 = arith.constant 0 : index
    %8 = vector.load %arg7[%c0_6, %c0_7] : memref<32x32xf32, #tpu.memory_space<vmem>>, vector<32x32xf32>
    tpu.vector_store %arg7[%c0_6, %c0_7], %7 {strides = array<i32>} : memref<32x32xf32, #tpu.memory_space<vmem>>, vector<32x32xf32>,
    %c0_i32_8 = arith.constant 0 : i32
    %9 = arith.cmpi eq, %arg2, %c0_i32_8 : i32
    %10 = arith.extui %9 : i1 to i32
    %c0_i32_9 = arith.constant 0 : i32
    %11 = arith.cmpi ne, %10, %c0_i32_9 : i32
    scf.if %11 {
      %c0_10 = arith.constant 0 : index
      %c0_11 = arith.constant 0 : index
      %12 = vector.load %arg7[%c0_10, %c0_11] : memref<32x32xf32, #tpu.memory_space<vmem>>, vector<32x32xf32>
      %c0_12 = arith.constant 0 : index
      %c0_13 = arith.constant 0 : index
      %13 = vector.load %arg5[%c0_12, %c0_13] : memref<1x32xf32, #tpu.memory_space<vmem>>, vector<1x32xf32>
      %14 = vector.broadcast %13 : vector<1x32xf32> to vector<32x32xf32>
      %15 = arith.addf %12, %14 : vector<32x32xf32>
      %c0_14 = arith.constant 0 : index
      %c0_15 = arith.constant 0 : index
      %16 = vector.load %arg6[%c0_14, %c0_15] : memref<32x32xf32, #tpu.memory_space<vmem>>, vector<32x32xf32>
      tpu.vector_store %arg6[%c0_14, %c0_15], %15 {strides = array<i32>} : memref<32x32xf32, #tpu.memory_space<vmem>>, vector<32x32xf32>,
    } else {
    }
    return
  }
  func.func @transform_0(%arg0: i32, %arg1: i32, %arg2: i32) -> (i32, i32) {
    %c0_i32 = arith.constant 0 : i32
    return %arg0, %arg2 : i32, i32
  }
  func.func @transform_1(%arg0: i32, %arg1: i32, %arg2: i32) -> (i32, i32) {
    %c0_i32 = arith.constant 0 : i32
    return %arg2, %arg1 : i32, i32
  }
  func.func @transform_2(%arg0: i32, %arg1: i32, %arg2: i32) -> (i32, i32) {
    %c0_i32 = arith.constant 0 : i32
    %c0_i32_0 = arith.constant 0 : i32
    return %c0_i32, %arg1 : i32, i32
  }
  func.func @transform_3(%arg0: i32, %arg1: i32, %arg2: i32) -> (i32, i32) {
    %c0_i32 = arith.constant 0 : i32
    return %arg0, %arg1 : i32, i32
  }
}

</mosaic_0001>

<llo_original>
// kernel: moe_masked_lora_attention_forward.6
$region0: #{moe_masked_lora_attention_forward.6}
  #allocation0 [shape = 'u32[]', space=smem, size = 0x4, offset = 0x4, fixed_abs, tag = 'smem constant byte address 0x4 - core index']
  #allocation1 [shape = 'u32[72,128]{1,0:T(1,128)}', space=vmem, size = 0x9000, scoped, tag = 'internal scratch']
  #allocation2 [shape = 'f32[16,96]{1,0:T(8,128)}', space=vmem, size = 0x2000, scoped, tag = 'scratch operand']
  %s0 = inlined_call_operand.hbm [shape: f32[16,32], index: 0, kind: input, shape index: {}]
  %s1 = inlined_call_operand.hbm [shape: f32[32,96], index: 1, kind: input, shape index: {}]
  %s2 = inlined_call_operand.vmem [shape: f32[1,96], index: 2, kind: input, shape index: {}]
  %s3 = inlined_call_operand.vmem [shape: f32[16,96], index: 3, kind: output, shape index: {}]
  %s4 = sld [smem:[#allocation0]]
  $region38: #{moe_masked_lora_attention_forward.6} parent=0
    _
  %s6 = ssub.s32 1, %s4
  %s7 = scalar_select 0, %s6, %s4
  $region1: #{moe_masked_lora_attention_forward.6} parent=0
    #allocation3 [shape = 'u8[8192]{0}', space=vmem, size = 0x2000, scoped, tag = 'input window, operand 0, single buffered']
    #allocation4 [shape = 's32[1]{0}', space=sflag, size = 0x4, scoped, tag = 'scoped memory for moe_masked_lora_attention_forward.6']
    #allocation5 [shape = 'u8[16384]{0}', space=vmem, size = 0x4000, scoped, tag = 'input window, operand 1, single buffered']
    #allocation6 [shape = 's32[1]{0}', space=sflag, size = 0x4, scoped, tag = 'scoped memory for moe_masked_lora_attention_forward.6']
    %8 = vsyncpa [#allocation4], 0
    %9 = vsyncpa [#allocation6], 0
    // Predicated region
    $region2: #{moe_masked_lora_attention_forward.6} parent=1 // pred_check
      _
    $region3: #{moe_masked_lora_attention_forward.6} parent=1 // pred_check_branch
      %11 = sbr.rel (0) target = $region5
    $region4: #{moe_masked_lora_attention_forward.6} parent=1 // pred_region
      %13 = vsyncadd [#allocation4], 0
      %s14 = sshll.u32 %s0, 4
      %s15 = int_to_ptr.hbm [resolvable:$true] %s14
      %s16 = sshll.u32 [#allocation3], 4
      %s17 = int_to_ptr.vmem [resolvable:$true] %s16
      %22 = dma.hbm_to_vmem [thread:$0]  %s15, 256, %s17, [#allocation4], 128, 128, 8
    $region5: #{moe_masked_lora_attention_forward.6} parent=1 // pred_fallthru
      _
    // Predicated region
    $region6: #{moe_masked_lora_attention_forward.6} parent=1 // pred_check
      _
    $region7: #{moe_masked_lora_attention_forward.6} parent=1 // pred_check_branch
      %24 = sbr.rel (0) target = $region9
    $region8: #{moe_masked_lora_attention_forward.6} parent=1 // pred_region
      %26 = vsyncadd [#allocation6], 0
      %s27 = sshll.u32 %s1, 4
      %s28 = int_to_ptr.hbm [resolvable:$true] %s27
      %s29 = sshll.u32 [#allocation5], 4
      %s30 = int_to_ptr.vmem [resolvable:$true] %s29
      %35 = dma.hbm_to_vmem [thread:$0]  %s28, 512, %s30, [#allocation6], 128, 128, 8
    $region9: #{moe_masked_lora_attention_forward.6} parent=1 // pred_fallthru
      _
    // Predicated region
    $region10: #{moe_masked_lora_attention_forward.6} parent=1 // pred_check
      _
    $region11: #{moe_masked_lora_attention_forward.6} parent=1 // pred_check_branch
      %37 = sbr.rel (0) target = $region13
    $region12: #{moe_masked_lora_attention_forward.6} parent=1 // pred_region
      _
    $region13: #{moe_masked_lora_attention_forward.6} parent=1 // pred_fallthru
      _
    // Predicated region
    $region14: #{moe_masked_lora_attention_forward.6} parent=1 // pred_check
      _
    $region15: #{moe_masked_lora_attention_forward.6} parent=1 // pred_check_branch
      %39 = sbr.rel (0) target = $region17
    $region16: #{moe_masked_lora_attention_forward.6} parent=1 // pred_region
      %41 = dma.done [#allocation4], 256
    $region17: #{moe_masked_lora_attention_forward.6} parent=1 // pred_fallthru
      _
    // Predicated region
    $region18: #{moe_masked_lora_attention_forward.6} parent=1 // pred_check
      _
    $region19: #{moe_masked_lora_attention_forward.6} parent=1 // pred_check_branch
      %43 = sbr.rel (0) target = $region21
    $region20: #{moe_masked_lora_attention_forward.6} parent=1 // pred_region
      %45 = dma.done [#allocation6], 512
    $region21: #{moe_masked_lora_attention_forward.6} parent=1 // pred_fallthru
      _
    %p46 = scmp.eq.s32.totalorder 0, 0
    // Predicated region
    $region22: #{moe_masked_lora_attention_forward.6} parent=1 // pred_check
      %p47 = pneg %p46
    $region23: #{moe_masked_lora_attention_forward.6} parent=1 // pred_check_branch
      %49 = sbr.rel (%p47) target = $region25
    $region24: #{moe_masked_lora_attention_forward.6} parent=1 // pred_region
      %vm50 = vcmask 785408
      %51 = vst.msk [vmem:[#allocation2] sm:$0xff] %vm50, 0.0
      %52 = vst.msk [vmem:[#allocation2 + $0x8] sm:$0xff] %vm50, 0.0
    $region25: #{moe_masked_lora_attention_forward.6} parent=1 // pred_fallthru
      _
    %v53 = vld [vmem:[#allocation2] sm:$0xff]
    %v54 = vld [vmem:[#allocation2 + $0x8] sm:$0xff]
    %v55 = vld [vmem:[#allocation3] sm:$0xff]
    %v56 = vld [vmem:[#allocation3 + $0x8] sm:$0xff]
    %v57 = vld [vmem:[#allocation5] sm:$0xff]
    %v58 = vld [vmem:[#allocation5 + $0x8] sm:$0xff]
    %v59 = vld [vmem:[#allocation5 + $0x10] sm:$0xff]
    %v60 = vld [vmem:[#allocation5 + $0x18] sm:$0xff]
    %vm61 = vcmask 261120
    %v63 = vsel %vm61, %v55, 0
    %v66 = vsel %vm61, %v56, 0
    %68 = vmatpush.msra.mxu0 0.0
    %69 = vmatpush.msra.mxu0 0.0
    %70 = vmatpush.msra.mxu0 0.0
    %71 = vmatpush.msra.mxu0 0.0
    %72 = vmatpush.msra.mxu0 0.0
    %73 = vmatpush.msra.mxu0 0.0
    %74 = vmatpush.msra.mxu0 0.0
    %75 = vmatpush.msra.mxu0 0.0
    %76 = vmatpush.msra.mxu0 0.0
    %77 = vmatpush.msra.mxu0 0.0
    %78 = vmatpush.msra.mxu0 0.0
    %79 = vmatpush.msra.mxu0 0.0
    %80 = vmatpush.msra.mxu0 %v60
    %81 = vmatpush.msra.mxu0 %v59
    %82 = vmatpush.msra.mxu0 %v58
    %83 = vmatpush.msra.mxu0 %v57
    %84 = vmatmul.f32.gmra.mxu0 %v63
    %v85 = vpop.f32.mrf.mxu0
    %v86 = vadd.f32 0.0, %v85
    %87 = vmatmul.f32.gmra.mxu0 %v66
    %v88 = vpop.f32.mrf.mxu0
    %v89 = vadd.f32 0.0, %v88
    %90 = vdwg.mxu0
    %v91 = vadd.f32 %v53, %v86
    %v92 = vadd.f32 %v54, %v89
    %vm93 = vcmask 785408
    %94 = vst.msk [vmem:[#allocation2] sm:$0xff] %vm93, %v91
    %95 = vst.msk [vmem:[#allocation2 + $0x8] sm:$0xff] %vm93, %v92
    // Predicated region
    $region26: #{moe_masked_lora_attention_forward.6} parent=1 // pred_check
      %p96 = pneg %p46
    $region27: #{moe_masked_lora_attention_forward.6} parent=1 // pred_check_branch
      %98 = sbr.rel (%p96) target = $region29
    $region28: #{moe_masked_lora_attention_forward.6} parent=1 // pred_region
      %v99 = vld [vmem:[#allocation2] sm:$0xff]
      %v100 = vld [vmem:[#allocation2 + $0x8] sm:$0xff]
      %v101 = vld [vmem:[%s2] sm:$0x1]
      %v103 = vperm.slane %v101, 0
      %v105 = vadd.f32 %v99, %v103
      %v106 = vadd.f32 %v100, %v103
      %107 = vst.msk [vmem:[%s3] sm:$0xff] %vm93, %v105
      %108 = vst.msk [vmem:[%s3 + $0x8] sm:$0xff] %vm93, %v106
    $region29: #{moe_masked_lora_attention_forward.6} parent=1 // pred_fallthru
      _
    // Predicated region
    $region30: #{moe_masked_lora_attention_forward.6} parent=1 // pred_check
      _
    $region31: #{moe_masked_lora_attention_forward.6} parent=1 // pred_check_branch
      %110 = sbr.rel (0) target = $region33
    $region32: #{moe_masked_lora_attention_forward.6} parent=1 // pred_region
      _
    $region33: #{moe_masked_lora_attention_forward.6} parent=1 // pred_fallthru
      _
    // Predicated region
    $region34: #{moe_masked_lora_attention_forward.6} parent=1 // pred_check
      _
    $region35: #{moe_masked_lora_attention_forward.6} parent=1 // pred_check_branch
      %112 = sbr.rel (0) target = $region37
    $region36: #{moe_masked_lora_attention_forward.6} parent=1 // pred_region
      _
    $region37: #{moe_masked_lora_attention_forward.6} parent=1 // pred_fallthru
      _
    %113 = vsyncpa [#allocation4], 1
    %114 = vsyncpa [#allocation6], 1

// kernel: moe_masked_lora_attention_forward.8
$region0: #{moe_masked_lora_attention_forward.8}
  #allocation0 [shape = 'u32[]', space=smem, size = 0x4, offset = 0x4, fixed_abs, tag = 'smem constant byte address 0x4 - core index']
  #allocation1 [shape = 'u32[72,128]{1,0:T(1,128)}', space=vmem, size = 0x9000, scoped, tag = 'internal scratch']
  #allocation2 [shape = 'f32[16,64]{1,0:T(8,128)}', space=vmem, size = 0x2000, scoped, tag = 'scratch operand']
  %s0 = inlined_call_operand.vmem [shape: f32[16,32], index: 0, kind: input, shape index: {}]
  %s1 = inlined_call_operand.vmem [shape: f32[32,64], index: 1, kind: input, shape index: {}]
  %s2 = inlined_call_operand.vmem [shape: f32[1,64], index: 2, kind: input, shape index: {}]
  %s3 = inlined_call_operand.vmem [shape: f32[16,64], index: 3, kind: output, shape index: {}]
  %s4 = sld [smem:[#allocation0]]
  $region30: #{moe_masked_lora_attention_forward.8} parent=0
    _
  %s6 = ssub.s32 1, %s4
  %s7 = scalar_select 0, %s6, %s4
  // Predicated region
  $region2: #{moe_masked_lora_attention_forward.8} parent=0 // pred_check
    _
  $region3: #{moe_masked_lora_attention_forward.8} parent=0 // pred_check_branch
    %9 = sbr.rel (0) target = $region5
  $region4: #{moe_masked_lora_attention_forward.8} parent=0 // pred_region
    _
  $region5: #{moe_masked_lora_attention_forward.8} parent=0 // pred_fallthru
    _
  // Predicated region
  $region6: #{moe_masked_lora_attention_forward.8} parent=0 // pred_check
    _
  $region7: #{moe_masked_lora_attention_forward.8} parent=0 // pred_check_branch
    %11 = sbr.rel (0) target = $region9
  $region8: #{moe_masked_lora_attention_forward.8} parent=0 // pred_region
    _
  $region9: #{moe_masked_lora_attention_forward.8} parent=0 // pred_fallthru
    _
  // Predicated region
  $region10: #{moe_masked_lora_attention_forward.8} parent=0 // pred_check
    _
  $region11: #{moe_masked_lora_attention_forward.8} parent=0 // pred_check_branch
    %13 = sbr.rel (0) target = $region13
  $region12: #{moe_masked_lora_attention_forward.8} parent=0 // pred_region
    _
  $region13: #{moe_masked_lora_attention_forward.8} parent=0 // pred_fallthru
    _
  %p14 = scmp.eq.s32.totalorder 0, 0
  // Predicated region
  $region14: #{moe_masked_lora_attention_forward.8} parent=0 // pred_check
    %p15 = pneg %p14
  $region15: #{moe_masked_lora_attention_forward.8} parent=0 // pred_check_branch
    %17 = sbr.rel (%p15) target = $region17
  $region16: #{moe_masked_lora_attention_forward.8} parent=0 // pred_region
    %vm18 = vcmask 523264
    %19 = vst.msk [vmem:[#allocation2] sm:$0xff] %vm18, 0.0
    %20 = vst.msk [vmem:[#allocation2 + $0x8] sm:$0xff] %vm18, 0.0
  $region17: #{moe_masked_lora_attention_forward.8} parent=0 // pred_fallthru
    _
  %v21 = vld [vmem:[#allocation2] sm:$0xff]
  %v22 = vld [vmem:[#allocation2 + $0x8] sm:$0xff]
  %v23 = vld [vmem:[%s0] sm:$0xff]
  %v24 = vld [vmem:[%s0 + $0x8] sm:$0xff]
  %v25 = vld [vmem:[%s1] sm:$0xff]
  %v26 = vld [vmem:[%s1 + $0x8] sm:$0xff]
  %v27 = vld [vmem:[%s1 + $0x10] sm:$0xff]
  %v28 = vld [vmem:[%s1 + $0x18] sm:$0xff]
  %vm29 = vcmask 261120
  %v31 = vsel %vm29, %v23, 0
  %v34 = vsel %vm29, %v24, 0
  %36 = vmatpush.msra.mxu0 0.0
  %37 = vmatpush.msra.mxu0 0.0
  %38 = vmatpush.msra.mxu0 0.0
  %39 = vmatpush.msra.mxu0 0.0
  %40 = vmatpush.msra.mxu0 0.0
  %41 = vmatpush.msra.mxu0 0.0
  %42 = vmatpush.msra.mxu0 0.0
  %43 = vmatpush.msra.mxu0 0.0
  %44 = vmatpush.msra.mxu0 0.0
  %45 = vmatpush.msra.mxu0 0.0
  %46 = vmatpush.msra.mxu0 0.0
  %47 = vmatpush.msra.mxu0 0.0
  %48 = vmatpush.msra.mxu0 %v28
  %49 = vmatpush.msra.mxu0 %v27
  %50 = vmatpush.msra.mxu0 %v26
  %51 = vmatpush.msra.mxu0 %v25
  %52 = vmatmul.f32.gmra.mxu0 %v31
  %v53 = vpop.f32.mrf.mxu0
  %v54 = vadd.f32 0.0, %v53
  %55 = vmatmul.f32.gmra.mxu0 %v34
  %v56 = vpop.f32.mrf.mxu0
  %v57 = vadd.f32 0.0, %v56
  %58 = vdwg.mxu0
  %v59 = vadd.f32 %v21, %v54
  %v60 = vadd.f32 %v22, %v57
  %vm61 = vcmask 523264
  %62 = vst.msk [vmem:[#allocation2] sm:$0xff] %vm61, %v59
  %63 = vst.msk [vmem:[#allocation2 + $0x8] sm:$0xff] %vm61, %v60
  // Predicated region
  $region18: #{moe_masked_lora_attention_forward.8} parent=0 // pred_check
    %p64 = pneg %p14
  $region19: #{moe_masked_lora_attention_forward.8} parent=0 // pred_check_branch
    %66 = sbr.rel (%p64) target = $region21
  $region20: #{moe_masked_lora_attention_forward.8} parent=0 // pred_region
    %v67 = vld [vmem:[#allocation2] sm:$0xff]
    %v68 = vld [vmem:[#allocation2 + $0x8] sm:$0xff]
    %v69 = vld [vmem:[%s2] sm:$0x1]
    %v71 = vperm.slane %v69, 0
    %v73 = vadd.f32 %v67, %v71
    %v74 = vadd.f32 %v68, %v71
    %75 = vst.msk [vmem:[%s3] sm:$0xff] %vm61, %v73
    %76 = vst.msk [vmem:[%s3 + $0x8] sm:$0xff] %vm61, %v74
  $region21: #{moe_masked_lora_attention_forward.8} parent=0 // pred_fallthru
    _
  // Predicated region
  $region22: #{moe_masked_lora_attention_forward.8} parent=0 // pred_check
    _
  $region23: #{moe_masked_lora_attention_forward.8} parent=0 // pred_check_branch
    %78 = sbr.rel (0) target = $region25
  $region24: #{moe_masked_lora_attention_forward.8} parent=0 // pred_region
    _
  $region25: #{moe_masked_lora_attention_forward.8} parent=0 // pred_fallthru
    _
  // Predicated region
  $region26: #{moe_masked_lora_attention_forward.8} parent=0 // pred_check
    _
  $region27: #{moe_masked_lora_attention_forward.8} parent=0 // pred_check_branch
    %80 = sbr.rel (0) target = $region29
  $region28: #{moe_masked_lora_attention_forward.8} parent=0 // pred_region
    _
  $region29: #{moe_masked_lora_attention_forward.8} parent=0 // pred_fallthru
    _

// kernel: moe_masked_lora_attention_forward.7
$region0: #{moe_masked_lora_attention_forward.7}
  #allocation0 [shape = 'u32[]', space=smem, size = 0x4, offset = 0x4, fixed_abs, tag = 'smem constant byte address 0x4 - core index']
  #allocation1 [shape = 'u32[72,128]{1,0:T(1,128)}', space=vmem, size = 0x9000, scoped, tag = 'internal scratch']
  #allocation2 [shape = 'f32[2,10]{1,0:T(2,128)}', space=vmem, size = 0x400, scoped, tag = 'scratch operand']
  %s0 = inlined_call_operand.vmem [shape: f32[2,256], index: 0, kind: input, shape index: {}]
  %s1 = inlined_call_operand.vmem [shape: f32[256,10], index: 1, kind: input, shape index: {}]
  %s2 = inlined_call_operand.vmem [shape: f32[1,10], index: 2, kind: input, shape index: {}]
  %s3 = inlined_call_operand.vmem [shape: f32[2,10], index: 3, kind: output, shape index: {}]
  %s4 = sld [smem:[#allocation0]]
  $region30: #{moe_masked_lora_attention_forward.7} parent=0
    _
  %s6 = ssub.s32 1, %s4
  %s7 = scalar_select 0, %s6, %s4
  // Predicated region
  $region2: #{moe_masked_lora_attention_forward.7} parent=0 // pred_check
    _
  $region3: #{moe_masked_lora_attention_forward.7} parent=0 // pred_check_branch
    %9 = sbr.rel (0) target = $region5
  $region4: #{moe_masked_lora_attention_forward.7} parent=0 // pred_region
    _
  $region5: #{moe_masked_lora_attention_forward.7} parent=0 // pred_fallthru
    _
  // Predicated region
  $region6: #{moe_masked_lora_attention_forward.7} parent=0 // pred_check
    _
  $region7: #{moe_masked_lora_attention_forward.7} parent=0 // pred_check_branch
    %11 = sbr.rel (0) target = $region9
  $region8: #{moe_masked_lora_attention_forward.7} parent=0 // pred_region
    _
  $region9: #{moe_masked_lora_attention_forward.7} parent=0 // pred_fallthru
    _
  // Predicated region
  $region10: #{moe_masked_lora_attention_forward.7} parent=0 // pred_check
    _
  $region11: #{moe_masked_lora_attention_forward.7} parent=0 // pred_check_branch
    %13 = sbr.rel (0) target = $region13
  $region12: #{moe_masked_lora_attention_forward.7} parent=0 // pred_region
    _
  $region13: #{moe_masked_lora_attention_forward.7} parent=0 // pred_fallthru
    _
  %p14 = scmp.eq.s32.totalorder 0, 0
  // Predicated region
  $region14: #{moe_masked_lora_attention_forward.7} parent=0 // pred_check
    %p15 = pneg %p14
  $region15: #{moe_masked_lora_attention_forward.7} parent=0 // pred_check_branch
    %17 = sbr.rel (%p15) target = $region17
  $region16: #{moe_masked_lora_attention_forward.7} parent=0 // pred_region
    %vm18 = vcmask 74752
    %19 = vst.msk [vmem:[#allocation2] sm:$0x3] %vm18, 0.0
  $region17: #{moe_masked_lora_attention_forward.7} parent=0 // pred_fallthru
    _
  %v20 = vld [vmem:[#allocation2] sm:$0x3]
  %v21 = vld [vmem:[%s0] sm:$0xf]
  %v22 = vld [vmem:[%s1] sm:$0xff]
  %v23 = vld [vmem:[%s1 + $0x8] sm:$0xff]
  %v24 = vld [vmem:[%s1 + $0x10] sm:$0xff]
  %v25 = vld [vmem:[%s1 + $0x18] sm:$0xff]
  %v26 = vld [vmem:[%s1 + $0x20] sm:$0xff]
  %v27 = vld [vmem:[%s1 + $0x28] sm:$0xff]
  %v28 = vld [vmem:[%s1 + $0x30] sm:$0xff]
  %v29 = vld [vmem:[%s1 + $0x38] sm:$0xff]
  %v30 = vld [vmem:[%s1 + $0x40] sm:$0xff]
  %v31 = vld [vmem:[%s1 + $0x48] sm:$0xff]
  %v32 = vld [vmem:[%s1 + $0x50] sm:$0xff]
  %v33 = vld [vmem:[%s1 + $0x58] sm:$0xff]
  %v34 = vld [vmem:[%s1 + $0x60] sm:$0xff]
  %v35 = vld [vmem:[%s1 + $0x68] sm:$0xff]
  %v36 = vld [vmem:[%s1 + $0x70] sm:$0xff]
  %v37 = vld [vmem:[%s1 + $0x78] sm:$0xff]
  %v38 = vld [vmem:[%s1 + $0x80] sm:$0xff]
  %v39 = vld [vmem:[%s1 + $0x88] sm:$0xff]
  %v40 = vld [vmem:[%s1 + $0x90] sm:$0xff]
  %v41 = vld [vmem:[%s1 + $0x98] sm:$0xff]
  %v42 = vld [vmem:[%s1 + $0xa0] sm:$0xff]
  %v43 = vld [vmem:[%s1 + $0xa8] sm:$0xff]
  %v44 = vld [vmem:[%s1 + $0xb0] sm:$0xff]
  %v45 = vld [vmem:[%s1 + $0xb8] sm:$0xff]
  %v46 = vld [vmem:[%s1 + $0xc0] sm:$0xff]
  %v47 = vld [vmem:[%s1 + $0xc8] sm:$0xff]
  %v48 = vld [vmem:[%s1 + $0xd0] sm:$0xff]
  %v49 = vld [vmem:[%s1 + $0xd8] sm:$0xff]
  %v50 = vld [vmem:[%s1 + $0xe0] sm:$0xff]
  %v51 = vld [vmem:[%s1 + $0xe8] sm:$0xff]
  %v52 = vld [vmem:[%s1 + $0xf0] sm:$0xff]
  %v53 = vld [vmem:[%s1 + $0xf8] sm:$0xff]
  %55 = vst [vmem:[#allocation1] ss:$4 sm:$0xff] %v21
  %v56 = vld.sshfl [vmem:[#allocation1] sm:$0xff pattern:$0x73625140]
  %v57 = vld.sshfl [vmem:[#allocation1 + $0x8] sm:$0xff pattern:$0x73625140]
  %60 = vmatpush.msra.mxu0 %v37
  %61 = vmatpush.msra.mxu0 %v36
  %62 = vmatpush.msra.mxu0 %v35
  %63 = vmatpush.msra.mxu0 %v34
  %64 = vmatpush.msra.mxu0 %v33
  %65 = vmatpush.msra.mxu0 %v32
  %66 = vmatpush.msra.mxu0 %v31
  %67 = vmatpush.msra.mxu0 %v30
  %68 = vmatpush.msra.mxu0 %v29
  %69 = vmatpush.msra.mxu0 %v28
  %70 = vmatpush.msra.mxu0 %v27
  %71 = vmatpush.msra.mxu0 %v26
  %72 = vmatpush.msra.mxu0 %v25
  %73 = vmatpush.msra.mxu0 %v24
  %74 = vmatpush.msra.mxu0 %v23
  %75 = vmatpush.msra.mxu0 %v22
  %76 = vmatmul.f32.gmra.mxu0 %v56
  %v77 = vpop.f32.mrf.mxu0
  %v78 = vadd.f32 0.0, %v77
  %79 = vdwg.mxu0
  %80 = vmatpush.msra.mxu0 %v53
  %81 = vmatpush.msra.mxu0 %v52
  %82 = vmatpush.msra.mxu0 %v51
  %83 = vmatpush.msra.mxu0 %v50
  %84 = vmatpush.msra.mxu0 %v49
  %85 = vmatpush.msra.mxu0 %v48
  %86 = vmatpush.msra.mxu0 %v47
  %87 = vmatpush.msra.mxu0 %v46
  %88 = vmatpush.msra.mxu0 %v45
  %89 = vmatpush.msra.mxu0 %v44
  %90 = vmatpush.msra.mxu0 %v43
  %91 = vmatpush.msra.mxu0 %v42
  %92 = vmatpush.msra.mxu0 %v41
  %93 = vmatpush.msra.mxu0 %v40
  %94 = vmatpush.msra.mxu0 %v39
  %95 = vmatpush.msra.mxu0 %v38
  %96 = vmatmul.f32.gmra.mxu0 %v57
  %v97 = vpop.f32.mrf.mxu0
  %v98 = vadd.f32 %v78, %v97
  %99 = vdwg.mxu0
  %v100 = vadd.f32 %v20, %v98
  %vm101 = vcmask 74752
  %102 = vst.msk [vmem:[#allocation2] sm:$0x3] %vm101, %v100
  // Predicated region
  $region18: #{moe_masked_lora_attention_forward.7} parent=0 // pred_check
    %p103 = pneg %p14
  $region19: #{moe_masked_lora_attention_forward.7} parent=0 // pred_check_branch
    %105 = sbr.rel (%p103) target = $region21
  $region20: #{moe_masked_lora_attention_forward.7} parent=0 // pred_region
    %v106 = vld [vmem:[#allocation2] sm:$0x3]
    %v107 = vld [vmem:[%s2] sm:$0x1]
    %v109 = vperm.slane %v107, 0
    %v111 = vadd.f32 %v106, %v109
    %112 = vst.msk [vmem:[%s3] sm:$0x3] %vm101, %v111
  $region21: #{moe_masked_lora_attention_forward.7} parent=0 // pred_fallthru
    _
  // Predicated region
  $region22: #{moe_masked_lora_attention_forward.7} parent=0 // pred_check
    _
  $region23: #{moe_masked_lora_attention_forward.7} parent=0 // pred_check_branch
    %114 = sbr.rel (0) target = $region25
  $region24: #{moe_masked_lora_attention_forward.7} parent=0 // pred_region
    _
  $region25: #{moe_masked_lora_attention_forward.7} parent=0 // pred_fallthru
    _
  // Predicated region
  $region26: #{moe_masked_lora_attention_forward.7} parent=0 // pred_check
    _
  $region27: #{moe_masked_lora_attention_forward.7} parent=0 // pred_check_branch
    %116 = sbr.rel (0) target = $region29
  $region28: #{moe_masked_lora_attention_forward.7} parent=0 // pred_region
    _
  $region29: #{moe_masked_lora_attention_forward.7} parent=0 // pred_fallthru
    _

// kernel: squeeze.2
$region0: #{squeeze.2}
  %s0 = inlined_call_operand.vmem [shape: f32[2,256], index: 0, kind: input, shape index: {}]
  %s1 = inlined_call_operand.vmem [shape: f32[2,8,4,8], index: 1, kind: output, shape index: {}]
  $region1: #{squeeze.2} parent=0
    #allocation0 [shape = 'u8[65536]{0}', space=vmem, size = 0x10000, scoped, tag = 'scoped mem for output reshape']
    #allocation1 [shape = 'u8[8192]{0}', space=vmem, size = 0x2000, scoped, tag = 'scoped mem for input reshape']
    %s3 = ssub.s32 4, 1
    %s4 = scalar_lea.vmem %s0, 2
    %v5 = vld [vmem:[%s4] sm:%s3]
    %s6 = scalar_lea.vmem [#allocation1], 8
    %7 = vst [vmem:[%s6] sm:%s3] %v5
    %v8 = vld [vmem:[%s0] sm:%s3]
    %9 = vst [vmem:[#allocation1] sm:%s3] %v8
    %v10 = vld [vmem:[#allocation1] sm:$0x3]
    %vm11 = vcmask 64512
    %12 = vst.msk [vmem:[#allocation0] sm:$0x1] %vm11, %v10
    %s13 = scalar_lea.vmem [#allocation0], 63
    %14 = vst.msk [vmem:[%s13] sm:$0x2] %vm11, %v10
    %s15 = scalar_lea.vmem [#allocation1], 8
    %v16 = vld [vmem:[%s15] sm:$0x3]
    %vm17 = vcmask 64512
    %s18 = scalar_lea.vmem [#allocation0], 32
    %19 = vst.msk [vmem:[%s18] sm:$0x1] %vm17, %v16
    %s20 = scalar_lea.vmem [#allocation0], 95
    %21 = vst.msk [vmem:[%s20] sm:$0x2] %vm17, %v16
    %v22 = vld.sshfl [vmem:[#allocation1] sm:$0xff pattern:$0x99999810]
    %23 = vrot.lane.b32.xlu0 %v22, 120
    %v24 = vpop.permute.xlu0 %23
    %vm25 = vcmask 64512
    %s26 = scalar_lea.vmem [#allocation0], 1
    %27 = vst.msk [vmem:[%s26] sm:$0x1] %vm25, %v24
    %s28 = scalar_lea.vmem [#allocation0], 64
    %29 = vst.msk [vmem:[%s28] sm:$0x2] %vm25, %v24
    %s30 = scalar_lea.vmem [#allocation0], 31
    %31 = vst.msk [vmem:[%s30] sm:$0x4] %vm25, %v24
    %s32 = scalar_lea.vmem [#allocation0], 94
    %33 = vst.msk [vmem:[%s32] sm:$0x8] %vm25, %v24
    %v34 = vld.sshfl [vmem:[#allocation1] sm:$0xff pattern:$0x99999810]
    %35 = vrot.lane.b32.xlu0 %v34, 112
    %v36 = vpop.permute.xlu0 %35
    %vm37 = vcmask 64512
    %s38 = scalar_lea.vmem [#allocation0], 2
    %39 = vst.msk [vmem:[%s38] sm:$0x1] %vm37, %v36
    %s40 = scalar_lea.vmem [#allocation0], 65
    %41 = vst.msk [vmem:[%s40] sm:$0x2] %vm37, %v36
    %s42 = scalar_lea.vmem [#allocation0], 32
    %43 = vst.msk [vmem:[%s42] sm:$0x4] %vm37, %v36
    %s44 = scalar_lea.vmem [#allocation0], 95
    %45 = vst.msk [vmem:[%s44] sm:$0x8] %vm37, %v36
    %v46 = vld.sshfl [vmem:[#allocation1] sm:$0xff pattern:$0x99999810]
    %47 = vrot.lane.b32.xlu0 %v46, 104
    %v48 = vpop.permute.xlu0 %47
    %vm49 = vcmask 64512
    %s50 = scalar_lea.vmem [#allocation0], 3
    %51 = vst.msk [vmem:[%s50] sm:$0x1] %vm49, %v48
    %s52 = scalar_lea.vmem [#allocation0], 66
    %53 = vst.msk [vmem:[%s52] sm:$0x2] %vm49, %v48
    %s54 = scalar_lea.vmem [#allocation0], 33
    %55 = vst.msk [vmem:[%s54] sm:$0x4] %vm49, %v48
    %s56 = scalar_lea.vmem [#allocation0], 96
    %57 = vst.msk [vmem:[%s56] sm:$0x8] %vm49, %v48
    %v58 = vld.sshfl [vmem:[#allocation1] sm:$0xff pattern:$0x99999810]
    %59 = vrot.lane.b32.xlu0 %v58, 96
    %v60 = vpop.permute.xlu0 %59
    %vm61 = vcmask 64512
    %s62 = scalar_lea.vmem [#allocation0], 8
    %63 = vst.msk [vmem:[%s62] sm:$0x1] %vm61, %v60
    %s64 = scalar_lea.vmem [#allocation0], 71
    %65 = vst.msk [vmem:[%s64] sm:$0x2] %vm61, %v60
    %s66 = scalar_lea.vmem [#allocation0], 38
    %67 = vst.msk [vmem:[%s66] sm:$0x4] %vm61, %v60
    %s68 = scalar_lea.vmem [#allocation0], 101
    %69 = vst.msk [vmem:[%s68] sm:$0x8] %vm61, %v60
    %v70 = vld.sshfl [vmem:[#allocation1] sm:$0xff pattern:$0x99999810]
    %71 = vrot.lane.b32.xlu0 %v70, 88
    %v72 = vpop.permute.xlu0 %71
    %vm73 = vcmask 64512
    %s74 = scalar_lea.vmem [#allocation0], 9
    %75 = vst.msk [vmem:[%s74] sm:$0x1] %vm73, %v72
    %s76 = scalar_lea.vmem [#allocation0], 72
    %77 = vst.msk [vmem:[%s76] sm:$0x2] %vm73, %v72
    %s78 = scalar_lea.vmem [#allocation0], 39
    %79 = vst.msk [vmem:[%s78] sm:$0x4] %vm73, %v72
    %s80 = scalar_lea.vmem [#allocation0], 102
    %81 = vst.msk [vmem:[%s80] sm:$0x8] %vm73, %v72
    %v82 = vld.sshfl [vmem:[#allocation1] sm:$0xff pattern:$0x99999810]
    %83 = vrot.lane.b32.xlu0 %v82, 80
    %v84 = vpop.permute.xlu0 %83
    %vm85 = vcmask 64512
    %s86 = scalar_lea.vmem [#allocation0], 10
    %87 = vst.msk [vmem:[%s86] sm:$0x1] %vm85, %v84
    %s88 = scalar_lea.vmem [#allocation0], 73
    %89 = vst.msk [vmem:[%s88] sm:$0x2] %vm85, %v84
    %s90 = scalar_lea.vmem [#allocation0], 40
    %91 = vst.msk [vmem:[%s90] sm:$0x4] %vm85, %v84
    %s92 = scalar_lea.vmem [#allocation0], 103
    %93 = vst.msk [vmem:[%s92] sm:$0x8] %vm85, %v84
    %v94 = vld.sshfl [vmem:[#allocation1] sm:$0xff pattern:$0x99999810]
    %95 = vrot.lane.b32.xlu0 %v94, 72
    %v96 = vpop.permute.xlu0 %95
    %vm97 = vcmask 64512
    %s98 = scalar_lea.vmem [#allocation0], 11
    %99 = vst.msk [vmem:[%s98] sm:$0x1] %vm97, %v96
    %s100 = scalar_lea.vmem [#allocation0], 74
    %101 = vst.msk [vmem:[%s100] sm:$0x2] %vm97, %v96
    %s102 = scalar_lea.vmem [#allocation0], 41
    %103 = vst.msk [vmem:[%s102] sm:$0x4] %vm97, %v96
    %s104 = scalar_lea.vmem [#allocation0], 104
    %105 = vst.msk [vmem:[%s104] sm:$0x8] %vm97, %v96
    %v106 = vld.sshfl [vmem:[#allocation1] sm:$0xff pattern:$0x99999810]
    %107 = vrot.lane.b32.xlu0 %v106, 64
    %v108 = vpop.permute.xlu0 %107
    %vm109 = vcmask 64512
    %s110 = scalar_lea.vmem [#allocation0], 16
    %111 = vst.msk [vmem:[%s110] sm:$0x1] %vm109, %v108
    %s112 = scalar_lea.vmem [#allocation0], 79
    %113 = vst.msk [vmem:[%s112] sm:$0x2] %vm109, %v108
    %s114 = scalar_lea.vmem [#allocation0], 46
    %115 = vst.msk [vmem:[%s114] sm:$0x4] %vm109, %v108
    %s116 = scalar_lea.vmem [#allocation0], 109
    %117 = vst.msk [vmem:[%s116] sm:$0x8] %vm109, %v108
    %v118 = vld.sshfl [vmem:[#allocation1] sm:$0xff pattern:$0x99999810]
    %119 = vrot.lane.b32.xlu0 %v118, 56
    %v120 = vpop.permute.xlu0 %119
    %vm121 = vcmask 64512
    %s122 = scalar_lea.vmem [#allocation0], 17
    %123 = vst.msk [vmem:[%s122] sm:$0x1] %vm121, %v120
    %s124 = scalar_lea.vmem [#allocation0], 80
    %125 = vst.msk [vmem:[%s124] sm:$0x2] %vm121, %v120
    %s126 = scalar_lea.vmem [#allocation0], 47
    %127 = vst.msk [vmem:[%s126] sm:$0x4] %vm121, %v120
    %s128 = scalar_lea.vmem [#allocation0], 110
    %129 = vst.msk [vmem:[%s128] sm:$0x8] %vm121, %v120
    %v130 = vld.sshfl [vmem:[#allocation1] sm:$0xff pattern:$0x99999810]
    %131 = vrot.lane.b32.xlu0 %v130, 48
    %v132 = vpop.permute.xlu0 %131
    %vm133 = vcmask 64512
    %s134 = scalar_lea.vmem [#allocation0], 18
    %135 = vst.msk [vmem:[%s134] sm:$0x1] %vm133, %v132
    %s136 = scalar_lea.vmem [#allocation0], 81
    %137 = vst.msk [vmem:[%s136] sm:$0x2] %vm133, %v132
    %s138 = scalar_lea.vmem [#allocation0], 48
    %139 = vst.msk [vmem:[%s138] sm:$0x4] %vm133, %v132
    %s140 = scalar_lea.vmem [#allocation0], 111
    %141 = vst.msk [vmem:[%s140] sm:$0x8] %vm133, %v132
    %v142 = vld.sshfl [vmem:[#allocation1] sm:$0xff pattern:$0x99999810]
    %143 = vrot.lane.b32.xlu0 %v142, 40
    %v144 = vpop.permute.xlu0 %143
    %vm145 = vcmask 64512
    %s146 = scalar_lea.vmem [#allocation0], 19
    %147 = vst.msk [vmem:[%s146] sm:$0x1] %vm145, %v144
    %s148 = scalar_lea.vmem [#allocation0], 82
    %149 = vst.msk [vmem:[%s148] sm:$0x2] %vm145, %v144
    %s150 = scalar_lea.vmem [#allocation0], 49
    %151 = vst.msk [vmem:[%s150] sm:$0x4] %vm145, %v144
    %s152 = scalar_lea.vmem [#allocation0], 112
    %153 = vst.msk [vmem:[%s152] sm:$0x8] %vm145, %v144
    %v154 = vld.sshfl [vmem:[#allocation1] sm:$0xff pattern:$0x99999810]
    %155 = vrot.lane.b32.xlu0 %v154, 32
    %v156 = vpop.permute.xlu0 %155
    %vm157 = vcmask 64512
    %s158 = scalar_lea.vmem [#allocation0], 24
    %159 = vst.msk [vmem:[%s158] sm:$0x1] %vm157, %v156
    %s160 = scalar_lea.vmem [#allocation0], 87
    %161 = vst.msk [vmem:[%s160] sm:$0x2] %vm157, %v156
    %s162 = scalar_lea.vmem [#allocation0], 54
    %163 = vst.msk [vmem:[%s162] sm:$0x4] %vm157, %v156
    %s164 = scalar_lea.vmem [#allocation0], 117
    %165 = vst.msk [vmem:[%s164] sm:$0x8] %vm157, %v156
    %v166 = vld.sshfl [vmem:[#allocation1] sm:$0xff pattern:$0x99999810]
    %167 = vrot.lane.b32.xlu0 %v166, 24
    %v168 = vpop.permute.xlu0 %167
    %vm169 = vcmask 64512
    %s170 = scalar_lea.vmem [#allocation0], 25
    %171 = vst.msk [vmem:[%s170] sm:$0x1] %vm169, %v168
    %s172 = scalar_lea.vmem [#allocation0], 88
    %173 = vst.msk [vmem:[%s172] sm:$0x2] %vm169, %v168
    %s174 = scalar_lea.vmem [#allocation0], 55
    %175 = vst.msk [vmem:[%s174] sm:$0x4] %vm169, %v168
    %s176 = scalar_lea.vmem [#allocation0], 118
    %177 = vst.msk [vmem:[%s176] sm:$0x8] %vm169, %v168
    %v178 = vld.sshfl [vmem:[#allocation1] sm:$0xff pattern:$0x99999810]
    %179 = vrot.lane.b32.xlu0 %v178, 16
    %v180 = vpop.permute.xlu0 %179
    %vm181 = vcmask 64512
    %s182 = scalar_lea.vmem [#allocation0], 26
    %183 = vst.msk [vmem:[%s182] sm:$0x1] %vm181, %v180
    %s184 = scalar_lea.vmem [#allocation0], 89
    %185 = vst.msk [vmem:[%s184] sm:$0x2] %vm181, %v180
    %s186 = scalar_lea.vmem [#allocation0], 56
    %187 = vst.msk [vmem:[%s186] sm:$0x4] %vm181, %v180
    %s188 = scalar_lea.vmem [#allocation0], 119
    %189 = vst.msk [vmem:[%s188] sm:$0x8] %vm181, %v180
    %v190 = vld.sshfl [vmem:[#allocation1] sm:$0xff pattern:$0x99999810]
    %191 = vrot.lane.b32.xlu0 %v190, 8
    %v192 = vpop.permute.xlu0 %191
    %vm193 = vcmask 64512
    %s194 = scalar_lea.vmem [#allocation0], 27
    %195 = vst.msk [vmem:[%s194] sm:$0x1] %vm193, %v192
    %s196 = scalar_lea.vmem [#allocation0], 90
    %197 = vst.msk [vmem:[%s196] sm:$0x2] %vm193, %v192
    %s198 = scalar_lea.vmem [#allocation0], 57
    %199 = vst.msk [vmem:[%s198] sm:$0x4] %vm193, %v192
    %s200 = scalar_lea.vmem [#allocation0], 120
    %201 = vst.msk [vmem:[%s200] sm:$0x8] %vm193, %v192
    %s203 = ssub.s32 16, 1
    %v204 = vld [vmem:[#allocation0] sm:%s203]
    %s206 = ssub.s32 16, 1
    %207 = vst [vmem:[%s1] sm:%s206] %v204
    %s208 = scalar_lea.vmem [#allocation0], 8
    %v209 = vld [vmem:[%s208] sm:%s203]
    %s211 = ssub.s32 16, 1
    %s212 = scalar_lea.vmem %s1, 4
    %213 = vst [vmem:[%s212] sm:%s211] %v209
    %s214 = scalar_lea.vmem [#allocation0], 16
    %v215 = vld [vmem:[%s214] sm:%s203]
    %s217 = ssub.s32 16, 1
    %s218 = scalar_lea.vmem %s1, 8
    %219 = vst [vmem:[%s218] sm:%s217] %v215
    %s220 = scalar_lea.vmem [#allocation0], 24
    %v221 = vld [vmem:[%s220] sm:%s203]
    %s223 = ssub.s32 16, 1
    %s224 = scalar_lea.vmem %s1, 12
    %225 = vst [vmem:[%s224] sm:%s223] %v221
    %s226 = scalar_lea.vmem [#allocation0], 32
    %v227 = vld [vmem:[%s226] sm:%s203]
    %s229 = ssub.s32 16, 1
    %s230 = scalar_lea.vmem %s1, 16
    %231 = vst [vmem:[%s230] sm:%s229] %v227
    %s232 = scalar_lea.vmem [#allocation0], 40
    %v233 = vld [vmem:[%s232] sm:%s203]
    %s235 = ssub.s32 16, 1
    %s236 = scalar_lea.vmem %s1, 20
    %237 = vst [vmem:[%s236] sm:%s235] %v233
    %s238 = scalar_lea.vmem [#allocation0], 48
    %v239 = vld [vmem:[%s238] sm:%s203]
    %s241 = ssub.s32 16, 1
    %s242 = scalar_lea.vmem %s1, 24
    %243 = vst [vmem:[%s242] sm:%s241] %v239
    %s244 = scalar_lea.vmem [#allocation0], 56
    %v245 = vld [vmem:[%s244] sm:%s203]
    %s247 = ssub.s32 16, 1
    %s248 = scalar_lea.vmem %s1, 28
    %249 = vst [vmem:[%s248] sm:%s247] %v245
    %s250 = scalar_lea.vmem [#allocation0], 64
    %v251 = vld [vmem:[%s250] sm:%s203]
    %s253 = ssub.s32 16, 1
    %s254 = scalar_lea.vmem %s1, 32
    %255 = vst [vmem:[%s254] sm:%s253] %v251
    %s256 = scalar_lea.vmem [#allocation0], 72
    %v257 = vld [vmem:[%s256] sm:%s203]
    %s259 = ssub.s32 16, 1
    %s260 = scalar_lea.vmem %s1, 36
    %261 = vst [vmem:[%s260] sm:%s259] %v257
    %s262 = scalar_lea.vmem [#allocation0], 80
    %v263 = vld [vmem:[%s262] sm:%s203]
    %s265 = ssub.s32 16, 1
    %s266 = scalar_lea.vmem %s1, 40
    %267 = vst [vmem:[%s266] sm:%s265] %v263
    %s268 = scalar_lea.vmem [#allocation0], 88
    %v269 = vld [vmem:[%s268] sm:%s203]
    %s271 = ssub.s32 16, 1
    %s272 = scalar_lea.vmem %s1, 44
    %273 = vst [vmem:[%s272] sm:%s271] %v269
    %s274 = scalar_lea.vmem [#allocation0], 96
    %v275 = vld [vmem:[%s274] sm:%s203]
    %s277 = ssub.s32 16, 1
    %s278 = scalar_lea.vmem %s1, 48
    %279 = vst [vmem:[%s278] sm:%s277] %v275
    %s280 = scalar_lea.vmem [#allocation0], 104
    %v281 = vld [vmem:[%s280] sm:%s203]
    %s283 = ssub.s32 16, 1
    %s284 = scalar_lea.vmem %s1, 52
    %285 = vst [vmem:[%s284] sm:%s283] %v281
    %s286 = scalar_lea.vmem [#allocation0], 112
    %v287 = vld [vmem:[%s286] sm:%s203]
    %s289 = ssub.s32 16, 1
    %s290 = scalar_lea.vmem %s1, 56
    %291 = vst [vmem:[%s290] sm:%s289] %v287
    %s292 = scalar_lea.vmem [#allocation0], 120
    %v293 = vld [vmem:[%s292] sm:%s203]
    %s295 = ssub.s32 16, 1
    %s296 = scalar_lea.vmem %s1, 60
    %297 = vst [vmem:[%s296] sm:%s295] %v293

// kernel: moe_masked_lora_attention_forward.9
$region0: #{moe_masked_lora_attention_forward.9}
  #allocation0 [shape = 'u32[]', space=smem, size = 0x4, offset = 0x4, fixed_abs, tag = 'smem constant byte address 0x4 - core index']
  #allocation1 [shape = 'u32[72,128]{1,0:T(1,128)}', space=vmem, size = 0x9000, scoped, tag = 'internal scratch']
  %s0 = inlined_call_operand.vmem [shape: f32[2,1,10], index: 0, kind: input, shape index: {}]
  %s1 = inlined_call_operand.vmem [shape: f32[2,2,1,384], index: 1, kind: input, shape index: {}]
  %s2 = inlined_call_operand.vmem [shape: f32[2,2,10,26], index: 2, kind: output, shape index: {}]
  %s3 = sld [smem:[#allocation0]]
  $region41: #{moe_masked_lora_attention_forward.9} parent=0
    _
  %s5 = ssub.s32 1, %s3
  %s6 = scalar_select 0, %s5, %s3
  loop: start=0, step=1, limit=6
  $region2: #{moe_masked_lora_attention_forward.9} parent=0 // loop_pre_header
    _
  $region3: #{moe_masked_lora_attention_forward.9} parent=0 // loop_header
    %s8 = sphi 0, %s12
    %p9 = scmp.ge.s32.totalorder %s8, 6
    %s15 = sphi 0, %s27
    %s16 = sphi 0, %s23
    %s17 = sphi 0, %s15
    %s18 = sphi 0, %s16
    %s19 = sphi 0, %s17
    %s20 = sphi 0, %s18
    %s30 = sphi 0, %s32
    %s33 = sphi 0, %s30
    %s34 = sphi 0, %s33
    %s50 = sphi 0, %s34
    %s58 = sphi 0, %s60
    %s61 = sphi 0, %s58
    %s62 = sphi 0, %s61
    %s78 = sphi 0, %s62
    %s86 = sphi 0, %s88
    %s89 = sphi 0, %s86
    %s90 = sphi 0, %s89
    %s106 = sphi 0, %s90
  $region4: #{moe_masked_lora_attention_forward.9} parent=0 // loop_header_branch
    %11 = sbr.rel (%p9) target = $region8
  $region5: #{moe_masked_lora_attention_forward.9} parent=0 // loop_body
    %s13 = ssub.s32 %s8, 1
    %s14 = ssub.s32 %s8, 2
    %s21 = sadd.s32 1, %s16
    %p22 = scmp.ge.s32.totalorder %s21, 2
    %s23 = scalar_select %p22, 0, %s21
    %s24 = sadd.s32 1, %s15
    %s25 = scalar_select %p22, %s24, %s15
    %p26 = scmp.ge.s32.totalorder %s25, 2
    %s27 = scalar_select %p26, 0, %s25
    %s28 = ssub.s32 %s15, %s27
    %p29 = scmp.eq.s32.totalorder %s28, 0
    %s31 = sadd.s32 %s30, 1
    %s32 = scalar_select %p29, %s30, %s31
    %p35 = pneg %p29
    %p36 = scmp.eq.s32.totalorder %s8, 3
    %p37 = por %p35, %p36
    %p38 = scmp.ne.s32.totalorder %s30, %s33
    %p39 = scmp.eq.s32.totalorder %s8, 0
    %p40 = por %p38, %p39
    %p41 = scmp.ne.s32.totalorder %s30, %s33
    %p42 = scmp.eq.s32.totalorder %s13, 3
    %p43 = por %p41, %p42
    %p44 = scmp.ne.s32.totalorder %s33, %s34
    %p45 = scmp.eq.s32.totalorder %s13, 0
    %p46 = por %p44, %p45
    %p47 = scmp.ne.s32.totalorder %s33, %s34
    %p48 = scmp.eq.s32.totalorder %s14, 3
    %p49 = por %p47, %p48
    %p51 = scmp.ne.s32.totalorder %s34, %s50
    %p52 = scmp.eq.s32.totalorder %s14, 0
    %p53 = por %p51, %p52
    %s54 = ssub.s32 %s15, %s27
    %s55 = ssub.s32 %s16, %s23
    %s56 = sor.u32 %s54, %s55
    %p57 = scmp.eq.s32.totalorder %s56, 0
    %s59 = sadd.s32 %s58, 1
    %s60 = scalar_select %p57, %s58, %s59
    %p63 = pneg %p57
    %p64 = scmp.eq.s32.totalorder %s8, 3
    %p65 = por %p63, %p64
    %p66 = scmp.ne.s32.totalorder %s58, %s61
    %p67 = scmp.eq.s32.totalorder %s8, 0
    %p68 = por %p66, %p67
    %p69 = scmp.ne.s32.totalorder %s58, %s61
    %p70 = scmp.eq.s32.totalorder %s13, 3
    %p71 = por %p69, %p70
    %p72 = scmp.ne.s32.totalorder %s61, %s62
    %p73 = scmp.eq.s32.totalorder %s13, 0
    %p74 = por %p72, %p73
    %p75 = scmp.ne.s32.totalorder %s61, %s62
    %p76 = scmp.eq.s32.totalorder %s14, 3
    %p77 = por %p75, %p76
    %p79 = scmp.ne.s32.totalorder %s62, %s78
    %p80 = scmp.eq.s32.totalorder %s14, 0
    %p81 = por %p79, %p80
    %s82 = ssub.s32 %s15, %s27
    %s83 = ssub.s32 %s16, %s23
    %s84 = sor.u32 %s82, %s83
    %p85 = scmp.eq.s32.totalorder %s84, 0
    %s87 = sadd.s32 %s86, 1
    %s88 = scalar_select %p85, %s86, %s87
    %p91 = pneg %p85
    %p92 = scmp.eq.s32.totalorder %s8, 3
    %p93 = por %p91, %p92
    %p94 = scmp.ne.s32.totalorder %s86, %s89
    %p95 = scmp.eq.s32.totalorder %s8, 0
    %p96 = por %p94, %p95
    %p97 = scmp.ne.s32.totalorder %s86, %s89
    %p98 = scmp.eq.s32.totalorder %s13, 3
    %p99 = por %p97, %p98
    %p100 = scmp.ne.s32.totalorder %s89, %s90
    %p101 = scmp.eq.s32.totalorder %s13, 0
    %p102 = por %p100, %p101
    %p103 = scmp.ne.s32.totalorder %s89, %s90
    %p104 = scmp.eq.s32.totalorder %s14, 3
    %p105 = por %p103, %p104
    %p107 = scmp.ne.s32.totalorder %s90, %s106
    %p108 = scmp.eq.s32.totalorder %s14, 0
    %p109 = por %p107, %p108
    %p110 = scmp.le.s32.totalorder 1, %s8
    %p111 = scmp.lt.s32.totalorder %s8, 5
    %p112 = pnand %p110, %p111
    %p113 = pneg %p112
    // Predicated region
    $region9: #{moe_masked_lora_attention_forward.9} parent=5 // pred_check
      _
    $region10: #{moe_masked_lora_attention_forward.9} parent=5 // pred_check_branch
      %115 = sbr.rel (%p112) target = $region12
    $region11: #{moe_masked_lora_attention_forward.9} parent=5 // pred_region
      %s116 = ssub.s32 %s8, 1
    $region12: #{moe_masked_lora_attention_forward.9} parent=5 // pred_fallthru
      _
    %p117 = scmp.lt.s32.totalorder %s8, 4
    // Predicated region
    $region13: #{moe_masked_lora_attention_forward.9} parent=5 // pred_check
      %p118 = pneg %p117
    $region14: #{moe_masked_lora_attention_forward.9} parent=5 // pred_check_branch
      %120 = sbr.rel (%p118) target = $region16
    $region15: #{moe_masked_lora_attention_forward.9} parent=5 // pred_region
      // Predicated region
      $region17: #{moe_masked_lora_attention_forward.9} parent=15 // pred_check
        %p121 = pneg %p40
      $region18: #{moe_masked_lora_attention_forward.9} parent=15 // pred_check_branch
        %123 = sbr.rel (%p121) target = $region20
      $region19: #{moe_masked_lora_attention_forward.9} parent=15 // pred_region
        %p124 = scmp.lt.s32.totalorder %s15, 1
        %s125 = scalar_select %p124, %s15, 1
        %s126 = scalar_lea.vmem %s0, %s125
      $region20: #{moe_masked_lora_attention_forward.9} parent=15 // pred_fallthru
        _
      // Predicated region
      $region21: #{moe_masked_lora_attention_forward.9} parent=15 // pred_check
        %p127 = pneg %p68
      $region22: #{moe_masked_lora_attention_forward.9} parent=15 // pred_check_branch
        %129 = sbr.rel (%p127) target = $region24
      $region23: #{moe_masked_lora_attention_forward.9} parent=15 // pred_region
        %p130 = scmp.lt.s32.totalorder %s15, 1
        %s131 = scalar_select %p130, %s15, 1
        %p132 = scmp.lt.s32.totalorder %s16, 1
        %s133 = scalar_select %p132, %s16, 1
        %s134 = smul.addr %s133, 3
        %s135 = smul.addr %s131, 6
        %s136 = sadd.s32 %s134, %s135
        %s137 = scalar_lea.vmem %s1, %s136
      $region24: #{moe_masked_lora_attention_forward.9} parent=15 // pred_fallthru
        _
    $region16: #{moe_masked_lora_attention_forward.9} parent=5 // pred_fallthru
      _
    %p138 = scmp.le.s32.totalorder 1, %s8
    %p139 = scmp.lt.s32.totalorder %s8, 5
    %p140 = pnand %p138, %p139
    %p141 = pneg %p140
    // Predicated region
    $region25: #{moe_masked_lora_attention_forward.9} parent=5 // pred_check
      _
    $region26: #{moe_masked_lora_attention_forward.9} parent=5 // pred_check_branch
      %143 = sbr.rel (%p140) target = $region28
    $region27: #{moe_masked_lora_attention_forward.9} parent=5 // pred_region
      %s144 = ssub.s32 %s8, 1
      %p145 = scmp.lt.s32.totalorder %s17, 1
      %s146 = scalar_select %p145, %s17, 1
      %s147 = scalar_lea.vmem %s0, %s146
      %p148 = pneg %p46
      %p149 = pneg %p43
      %p150 = scmp.lt.s32.totalorder %s17, 1
      %s151 = scalar_select %p150, %s17, 1
      %p152 = scmp.lt.s32.totalorder %s18, 1
      %s153 = scalar_select %p152, %s18, 1
      %s154 = smul.addr %s153, 3
      %s155 = smul.addr %s151, 6
      %s156 = sadd.s32 %s154, %s155
      %s157 = scalar_lea.vmem %s1, %s156
      %p158 = pneg %p74
      %p159 = pneg %p71
      %p160 = pneg %p102
      %p161 = pneg %p99
      %p162 = scmp.lt.s32.totalorder %s17, 1
      %s163 = scalar_select %p162, %s17, 1
      %p164 = scmp.lt.s32.totalorder %s18, 1
      %s165 = scalar_select %p164, %s18, 1
      %s166 = smul.addr %s165, 2
      %s167 = smul.addr %s163, 4
      %s168 = sadd.s32 %s166, %s167
      %s169 = smul.addr %s168, 8
      %s170 = scalar_lea.vmem %s2, %s169
      %p171 = scmp.lt.s32.totalorder %s17, 1
      %s172 = scalar_select %p171, %s17, 1
      %s173 = scalar_lea.vmem %s0, %s172
      %p174 = scmp.lt.s32.totalorder %s17, 1
      %s175 = scalar_select %p174, %s17, 1
      %p176 = scmp.lt.s32.totalorder %s18, 1
      %s177 = scalar_select %p176, %s18, 1
      %s178 = smul.addr %s177, 3
      %s179 = smul.addr %s175, 6
      %s180 = sadd.s32 %s178, %s179
      %s181 = scalar_lea.vmem %s1, %s180
      %p182 = scmp.lt.s32.totalorder %s17, 1
      %s183 = scalar_select %p182, %s17, 1
      %p184 = scmp.lt.s32.totalorder %s18, 1
      %s185 = scalar_select %p184, %s18, 1
      %s186 = smul.addr %s185, 2
      %s187 = smul.addr %s183, 4
      %s188 = sadd.s32 %s186, %s187
      %s189 = smul.addr %s188, 8
      %s190 = scalar_lea.vmem %s2, %s189
      %v191 = vld [vmem:[%s173] sm:$0x1]
      %v192 = vlaneseq
      %v193 = vshrl.u32 %v192, 7
      %v194 = vadd.s32 %v193, 8
      %v195 = vld [vmem:[%s181] sm:$0x1]
      %197 = vset.pattern.permute.xlu0 0
      %198 = vperm.xlu0 %197, %v191
      %v199 = vpop.permute.xlu0 %198
      %v201 = vperm.slane %v199, 0
      %v202 = vmul.f32 %v201, %v195
      %v204 = vperm.slane %v202, 0
      %v206 = vadd.f32 %v204, 0.0
      %vm207 = vcmp.lt.s32.totalorder %v193, 4
      %vm208 = vcmp.lt.s32.totalorder %v194, 4
      %v210 = vperm.slane %v195, 0
      %212 = vrot.lane.b32.xlu0 %v210, 127
      %v213 = vpop.permute.xlu0 %212
      %v215 = vsel %vm207, %v210, %v213
      %v216 = vsel %vm208, %v210, %v213
      %v217 = vperm.slane %v191, 0
      %218 = vset.pattern.permute.xlu0 1
      %219 = vperm.xlu0 %218, %v217
      %v220 = vpop.permute.xlu0 %219
      %v222 = vmul.f32 %v220, %v215
      %v223 = vmul.f32 %v220, %v216
      %226 = vrot.lane.b32.xlu0 %v222, 103
      %v227 = vpop.permute.xlu0 %226
      %228 = vrot.lane.b32.xlu0 %v223, 103
      %v229 = vpop.permute.xlu0 %228
      %v232 = vadd.f32 %v206, %v227
      %v233 = vadd.f32 %v206, %v229
      %vm234 = vcmp.lt.s32.totalorder %v193, 8
      %vm235 = vcmp.lt.s32.totalorder %v194, 8
      %v236 = vsel %vm234, %v210, %v213
      %v237 = vsel %vm235, %v210, %v213
      %238 = vset.pattern.permute.xlu0 2
      %239 = vperm.xlu0 %238, %v217
      %v240 = vpop.permute.xlu0 %239
      %v242 = vmul.f32 %v240, %v236
      %v243 = vmul.f32 %v240, %v237
      %246 = vrot.lane.b32.xlu0 %v242, 77
      %v247 = vpop.permute.xlu0 %246
      %248 = vrot.lane.b32.xlu0 %v243, 77
      %v249 = vpop.permute.xlu0 %248
      %v252 = vadd.f32 %v232, %v247
      %v253 = vadd.f32 %v233, %v249
      %vm254 = vcmp.lt.s32.totalorder %v193, 2
      %vm255 = vcmp.lt.s32.totalorder %v194, 2
      %v256 = vsel %vm254, %v210, %v213
      %v257 = vsel %vm255, %v210, %v213
      %258 = vset.pattern.permute.xlu0 3
      %259 = vperm.xlu0 %258, %v217
      %v260 = vpop.permute.xlu0 %259
      %v262 = vmul.f32 %v260, %v256
      %v263 = vmul.f32 %v260, %v257
      %266 = vrot.lane.b32.xlu0 %v262, 52
      %v267 = vpop.permute.xlu0 %266
      %268 = vrot.lane.b32.xlu0 %v263, 52
      %v269 = vpop.permute.xlu0 %268
      %v272 = vadd.f32 %v252, %v267
      %v273 = vadd.f32 %v253, %v269
      %v274 = vld [vmem:[%s181] sm:$0x3]
      %vm275 = vcmp.lt.s32.totalorder %v193, 6
      %vm276 = vcmp.lt.s32.totalorder %v194, 6
      %v278 = vperm.slane %v274, 0
      %v279 = vperm.slane %v274, 1
      %280 = vrot.lane.b32.xlu0 %v278, 127
      %v281 = vpop.permute.xlu0 %280
      %282 = vrot.lane.b32.xlu0 %v279, 127
      %v283 = vpop.permute.xlu0 %282
      %vm284 = vcmask 1039360
      %v285 = vsel %vm284, %v281, %v283
      %v287 = vsel %vm275, %v210, %v285
      %v288 = vsel %vm276, %v210, %v285
      %289 = vset.pattern.permute.xlu0 4
      %290 = vperm.xlu0 %289, %v217
      %v291 = vpop.permute.xlu0 %290
      %v293 = vmul.f32 %v291, %v287
      %v294 = vmul.f32 %v291, %v288
      %297 = vrot.lane.b32.xlu0 %v293, 26
      %v298 = vpop.permute.xlu0 %297
      %299 = vrot.lane.b32.xlu0 %v294, 26
      %v300 = vpop.permute.xlu0 %299
      %v303 = vadd.f32 %v272, %v298
      %v304 = vadd.f32 %v273, %v300
      %v305 = vld [vmem:[%s181 + $0x1] sm:$0x1]
      %306 = vset.pattern.permute.xlu0 5
      %307 = vperm.xlu0 %306, %v191
      %v308 = vpop.permute.xlu0 %307
      %v310 = vperm.slane %v308, 0
      %v311 = vmul.f32 %v310, %v305
      %v313 = vperm.slane %v311, 0
      %v315 = vadd.f32 %v303, %v313
      %v316 = vadd.f32 %v304, %v313
      %v318 = vperm.slane %v305, 0
      %320 = vrot.lane.b32.xlu0 %v318, 127
      %v321 = vpop.permute.xlu0 %320
      %v323 = vsel %vm207, %v318, %v321
      %v324 = vsel %vm208, %v318, %v321
      %325 = vset.pattern.permute.xlu0 6
      %326 = vperm.xlu0 %325, %v217
      %v327 = vpop.permute.xlu0 %326
      %v329 = vmul.f32 %v327, %v323
      %v330 = vmul.f32 %v327, %v324
      %333 = vrot.lane.b32.xlu0 %v329, 103
      %v334 = vpop.permute.xlu0 %333
      %335 = vrot.lane.b32.xlu0 %v330, 103
      %v336 = vpop.permute.xlu0 %335
      %v339 = vadd.f32 %v315, %v334
      %v340 = vadd.f32 %v316, %v336
      %v341 = vsel %vm234, %v318, %v321
      %v342 = vsel %vm235, %v318, %v321
      %343 = vset.pattern.permute.xlu0 7
      %344 = vperm.xlu0 %343, %v217
      %v345 = vpop.permute.xlu0 %344
      %v347 = vmul.f32 %v345, %v341
      %v348 = vmul.f32 %v345, %v342
      %351 = vrot.lane.b32.xlu0 %v347, 77
      %v352 = vpop.permute.xlu0 %351
      %353 = vrot.lane.b32.xlu0 %v348, 77
      %v354 = vpop.permute.xlu0 %353
      %v357 = vadd.f32 %v339, %v352
      %v358 = vadd.f32 %v340, %v354
      %v359 = vsel %vm254, %v318, %v321
      %v360 = vsel %vm255, %v318, %v321
      %361 = vset.pattern.permute.xlu0 8
      %362 = vperm.xlu0 %361, %v217
      %v363 = vpop.permute.xlu0 %362
      %v365 = vmul.f32 %v363, %v359
      %v366 = vmul.f32 %v363, %v360
      %369 = vrot.lane.b32.xlu0 %v365, 52
      %v370 = vpop.permute.xlu0 %369
      %371 = vrot.lane.b32.xlu0 %v366, 52
      %v372 = vpop.permute.xlu0 %371
      %v375 = vadd.f32 %v357, %v370
      %v376 = vadd.f32 %v358, %v372
      %v377 = vld [vmem:[%s181 + $0x1] sm:$0x3]
      %v379 = vperm.slane %v377, 0
      %v380 = vperm.slane %v377, 1
      %381 = vrot.lane.b32.xlu0 %v379, 127
      %v382 = vpop.permute.xlu0 %381
      %383 = vrot.lane.b32.xlu0 %v380, 127
      %v384 = vpop.permute.xlu0 %383
      %v385 = vsel %vm284, %v382, %v384
      %v387 = vsel %vm275, %v318, %v385
      %v388 = vsel %vm276, %v318, %v385
      %389 = vset.pattern.permute.xlu0 9
      %390 = vperm.xlu0 %389, %v217
      %v391 = vpop.permute.xlu0 %390
      %v393 = vmul.f32 %v391, %v387
      %v394 = vmul.f32 %v391, %v388
      %397 = vrot.lane.b32.xlu0 %v393, 26
      %v398 = vpop.permute.xlu0 %397
      %399 = vrot.lane.b32.xlu0 %v394, 26
      %v400 = vpop.permute.xlu0 %399
      %v403 = vadd.f32 %v375, %v398
      %v404 = vadd.f32 %v376, %v400
      %vm405 = vcmask 211968
      %406 = vst.msk [vmem:[%s190] sm:$0xff] %vm405, %v403
      %vm407 = vcmask 205824
      %408 = vst.msk [vmem:[%s190 + $0x8] sm:$0x3] %vm407, %v404
      %p409 = scmp.lt.s32.totalorder %s17, 1
      %s410 = scalar_select %p409, %s17, 1
      %p411 = scmp.lt.s32.totalorder %s18, 1
      %s412 = scalar_select %p411, %s18, 1
      %s413 = smul.addr %s412, 2
      %s414 = smul.addr %s410, 4
      %s415 = sadd.s32 %s413, %s414
      %s416 = smul.addr %s415, 8
      %s417 = scalar_lea.vmem %s2, %s416
      // Predicated region
      $region29: #{moe_masked_lora_attention_forward.9} parent=27 // pred_check
        %p418 = pneg %p99
      $region30: #{moe_masked_lora_attention_forward.9} parent=27 // pred_check_branch
        %420 = sbr.rel (%p418) target = $region32
      $region31: #{moe_masked_lora_attention_forward.9} parent=27 // pred_region
        _
      $region32: #{moe_masked_lora_attention_forward.9} parent=27 // pred_fallthru
        _
    $region28: #{moe_masked_lora_attention_forward.9} parent=5 // pred_fallthru
      _
    %p421 = scmp.le.s32.totalorder 2, %s8
    // Predicated region
    $region33: #{moe_masked_lora_attention_forward.9} parent=5 // pred_check
      %p422 = pneg %p421
    $region34: #{moe_masked_lora_attention_forward.9} parent=5 // pred_check_branch
      %424 = sbr.rel (%p422) target = $region36
    $region35: #{moe_masked_lora_attention_forward.9} parent=5 // pred_region
      %s425 = ssub.s32 %s8, 2
      // Predicated region
      $region37: #{moe_masked_lora_attention_forward.9} parent=35 // pred_check
        %p426 = pneg %p105
      $region38: #{moe_masked_lora_attention_forward.9} parent=35 // pred_check_branch
        %428 = sbr.rel (%p426) target = $region40
      $region39: #{moe_masked_lora_attention_forward.9} parent=35 // pred_region
        %p429 = scmp.lt.s32.totalorder %s19, 1
        %s430 = scalar_select %p429, %s19, 1
        %p431 = scmp.lt.s32.totalorder %s20, 1
        %s432 = scalar_select %p431, %s20, 1
        %s433 = smul.addr %s432, 2
        %s434 = smul.addr %s430, 4
        %s435 = sadd.s32 %s433, %s434
        %s436 = smul.addr %s435, 8
        %s437 = scalar_lea.vmem %s2, %s436
      $region40: #{moe_masked_lora_attention_forward.9} parent=35 // pred_fallthru
        _
    $region36: #{moe_masked_lora_attention_forward.9} parent=5 // pred_fallthru
      _
  $region6: #{moe_masked_lora_attention_forward.9} parent=0 // loop_footer
    %s12 = sadd.s32 1, %s8
  $region7: #{moe_masked_lora_attention_forward.9} parent=0 // loop_footer_branch
    %7 = sbr.rel target = $region3
  $region8: #{moe_masked_lora_attention_forward.9} parent=0 // loop_exit
    _

// kernel: moe_masked_lora_attention_forward.10
$region0: #{moe_masked_lora_attention_forward.10}
  #allocation0 [shape = 'u32[]', space=smem, size = 0x4, offset = 0x4, fixed_abs, tag = 'smem constant byte address 0x4 - core index']
  #allocation1 [shape = 'u32[72,128]{1,0:T(1,128)}', space=vmem, size = 0x9000, scoped, tag = 'internal scratch']
  %s0 = inlined_call_operand.vmem [shape: f32[2,4,8,8], index: 0, kind: input, shape index: {}]
  %s1 = inlined_call_operand.vmem [shape: f32[2,2,4,8,8], index: 1, kind: input, shape index: {}]
  %s2 = inlined_call_operand.vmem [shape: f32[2,2,4,8,8], index: 2, kind: input, shape index: {}]
  %s3 = inlined_call_operand.vmem [shape: f32[2,2,4,8,8], index: 3, kind: output, shape index: {}]
  %s4 = sld [smem:[#allocation0]]
  $region45: #{moe_masked_lora_attention_forward.10} parent=0
    _
  %s6 = ssub.s32 1, %s4
  %s7 = scalar_select 0, %s6, %s4
  loop: start=0, step=1, limit=10
  $region2: #{moe_masked_lora_attention_forward.10} parent=0 // loop_pre_header
    _
  $region3: #{moe_masked_lora_attention_forward.10} parent=0 // loop_header
    %s9 = sphi 0, %s13
    %p10 = scmp.ge.s32.totalorder %s9, 10
    %s16 = sphi 0, %s35
    %s17 = sphi 0, %s31
    %s18 = sphi 0, %s27
    %s19 = sphi 0, %s16
    %s20 = sphi 0, %s17
    %s21 = sphi 0, %s18
    %s22 = sphi 0, %s19
    %s23 = sphi 0, %s20
    %s24 = sphi 0, %s21
    %s40 = sphi 0, %s42
    %s43 = sphi 0, %s40
    %s44 = sphi 0, %s43
    %s60 = sphi 0, %s44
    %s70 = sphi 0, %s72
    %s73 = sphi 0, %s70
    %s74 = sphi 0, %s73
    %s90 = sphi 0, %s74
    %s100 = sphi 0, %s102
    %s103 = sphi 0, %s100
    %s104 = sphi 0, %s103
    %s120 = sphi 0, %s104
    %s130 = sphi 0, %s132
    %s133 = sphi 0, %s130
    %s134 = sphi 0, %s133
    %s150 = sphi 0, %s134
  $region4: #{moe_masked_lora_attention_forward.10} parent=0 // loop_header_branch
    %12 = sbr.rel (%p10) target = $region8
  $region5: #{moe_masked_lora_attention_forward.10} parent=0 // loop_body
    %s14 = ssub.s32 %s9, 1
    %s15 = ssub.s32 %s9, 2
    %s25 = sadd.s32 1, %s18
    %p26 = scmp.ge.s32.totalorder %s25, 2
    %s27 = scalar_select %p26, 0, %s25
    %s28 = sadd.s32 1, %s17
    %s29 = scalar_select %p26, %s28, %s17
    %p30 = scmp.ge.s32.totalorder %s29, 2
    %s31 = scalar_select %p30, 0, %s29
    %s32 = sadd.s32 1, %s16
    %s33 = scalar_select %p30, %s32, %s16
    %p34 = scmp.ge.s32.totalorder %s33, 2
    %s35 = scalar_select %p34, 0, %s33
    %s36 = ssub.s32 %s16, %s35
    %s37 = ssub.s32 %s17, %s31
    %s38 = sor.u32 %s36, %s37
    %p39 = scmp.eq.s32.totalorder %s38, 0
    %s41 = sadd.s32 %s40, 1
    %s42 = scalar_select %p39, %s40, %s41
    %p45 = pneg %p39
    %p46 = scmp.eq.s32.totalorder %s9, 7
    %p47 = por %p45, %p46
    %p48 = scmp.ne.s32.totalorder %s40, %s43
    %p49 = scmp.eq.s32.totalorder %s9, 0
    %p50 = por %p48, %p49
    %p51 = scmp.ne.s32.totalorder %s40, %s43
    %p52 = scmp.eq.s32.totalorder %s14, 7
    %p53 = por %p51, %p52
    %p54 = scmp.ne.s32.totalorder %s43, %s44
    %p55 = scmp.eq.s32.totalorder %s14, 0
    %p56 = por %p54, %p55
    %p57 = scmp.ne.s32.totalorder %s43, %s44
    %p58 = scmp.eq.s32.totalorder %s15, 7
    %p59 = por %p57, %p58
    %p61 = scmp.ne.s32.totalorder %s44, %s60
    %p62 = scmp.eq.s32.totalorder %s15, 0
    %p63 = por %p61, %p62
    %s64 = ssub.s32 %s18, %s27
    %s65 = ssub.s32 %s16, %s35
    %s66 = sor.u32 %s64, %s65
    %s67 = ssub.s32 %s17, %s31
    %s68 = sor.u32 %s66, %s67
    %p69 = scmp.eq.s32.totalorder %s68, 0
    %s71 = sadd.s32 %s70, 1
    %s72 = scalar_select %p69, %s70, %s71
    %p75 = pneg %p69
    %p76 = scmp.eq.s32.totalorder %s9, 7
    %p77 = por %p75, %p76
    %p78 = scmp.ne.s32.totalorder %s70, %s73
    %p79 = scmp.eq.s32.totalorder %s9, 0
    %p80 = por %p78, %p79
    %p81 = scmp.ne.s32.totalorder %s70, %s73
    %p82 = scmp.eq.s32.totalorder %s14, 7
    %p83 = por %p81, %p82
    %p84 = scmp.ne.s32.totalorder %s73, %s74
    %p85 = scmp.eq.s32.totalorder %s14, 0
    %p86 = por %p84, %p85
    %p87 = scmp.ne.s32.totalorder %s73, %s74
    %p88 = scmp.eq.s32.totalorder %s15, 7
    %p89 = por %p87, %p88
    %p91 = scmp.ne.s32.totalorder %s74, %s90
    %p92 = scmp.eq.s32.totalorder %s15, 0
    %p93 = por %p91, %p92
    %s94 = ssub.s32 %s18, %s27
    %s95 = ssub.s32 %s16, %s35
    %s96 = sor.u32 %s94, %s95
    %s97 = ssub.s32 %s17, %s31
    %s98 = sor.u32 %s96, %s97
    %p99 = scmp.eq.s32.totalorder %s98, 0
    %s101 = sadd.s32 %s100, 1
    %s102 = scalar_select %p99, %s100, %s101
    %p105 = pneg %p99
    %p106 = scmp.eq.s32.totalorder %s9, 7
    %p107 = por %p105, %p106
    %p108 = scmp.ne.s32.totalorder %s100, %s103
    %p109 = scmp.eq.s32.totalorder %s9, 0
    %p110 = por %p108, %p109
    %p111 = scmp.ne.s32.totalorder %s100, %s103
    %p112 = scmp.eq.s32.totalorder %s14, 7
    %p113 = por %p111, %p112
    %p114 = scmp.ne.s32.totalorder %s103, %s104
    %p115 = scmp.eq.s32.totalorder %s14, 0
    %p116 = por %p114, %p115
    %p117 = scmp.ne.s32.totalorder %s103, %s104
    %p118 = scmp.eq.s32.totalorder %s15, 7
    %p119 = por %p117, %p118
    %p121 = scmp.ne.s32.totalorder %s104, %s120
    %p122 = scmp.eq.s32.totalorder %s15, 0
    %p123 = por %p121, %p122
    %s124 = ssub.s32 %s18, %s27
    %s125 = ssub.s32 %s16, %s35
    %s126 = sor.u32 %s124, %s125
    %s127 = ssub.s32 %s17, %s31
    %s128 = sor.u32 %s126, %s127
    %p129 = scmp.eq.s32.totalorder %s128, 0
    %s131 = sadd.s32 %s130, 1
    %s132 = scalar_select %p129, %s130, %s131
    %p135 = pneg %p129
    %p136 = scmp.eq.s32.totalorder %s9, 7
    %p137 = por %p135, %p136
    %p138 = scmp.ne.s32.totalorder %s130, %s133
    %p139 = scmp.eq.s32.totalorder %s9, 0
    %p140 = por %p138, %p139
    %p141 = scmp.ne.s32.totalorder %s130, %s133
    %p142 = scmp.eq.s32.totalorder %s14, 7
    %p143 = por %p141, %p142
    %p144 = scmp.ne.s32.totalorder %s133, %s134
    %p145 = scmp.eq.s32.totalorder %s14, 0
    %p146 = por %p144, %p145
    %p147 = scmp.ne.s32.totalorder %s133, %s134
    %p148 = scmp.eq.s32.totalorder %s15, 7
    %p149 = por %p147, %p148
    %p151 = scmp.ne.s32.totalorder %s134, %s150
    %p152 = scmp.eq.s32.totalorder %s15, 0
    %p153 = por %p151, %p152
    %p154 = scmp.le.s32.totalorder 1, %s9
    %p155 = scmp.lt.s32.totalorder %s9, 9
    %p156 = pnand %p154, %p155
    %p157 = pneg %p156
    // Predicated region
    $region9: #{moe_masked_lora_attention_forward.10} parent=5 // pred_check
      _
    $region10: #{moe_masked_lora_attention_forward.10} parent=5 // pred_check_branch
      %159 = sbr.rel (%p156) target = $region12
    $region11: #{moe_masked_lora_attention_forward.10} parent=5 // pred_region
      %s160 = ssub.s32 %s9, 1
    $region12: #{moe_masked_lora_attention_forward.10} parent=5 // pred_fallthru
      _
    %p161 = scmp.lt.s32.totalorder %s9, 8
    // Predicated region
    $region13: #{moe_masked_lora_attention_forward.10} parent=5 // pred_check
      %p162 = pneg %p161
    $region14: #{moe_masked_lora_attention_forward.10} parent=5 // pred_check_branch
      %164 = sbr.rel (%p162) target = $region16
    $region15: #{moe_masked_lora_attention_forward.10} parent=5 // pred_region
      // Predicated region
      $region17: #{moe_masked_lora_attention_forward.10} parent=15 // pred_check
        %p165 = pneg %p50
      $region18: #{moe_masked_lora_attention_forward.10} parent=15 // pred_check_branch
        %167 = sbr.rel (%p165) target = $region20
      $region19: #{moe_masked_lora_attention_forward.10} parent=15 // pred_region
        %s168 = smul.u32 2, %s17
        %p169 = scmp.lt.s32.totalorder %s16, 1
        %s170 = scalar_select %p169, %s16, 1
        %p171 = scmp.lt.s32.totalorder %s168, 3
        %s172 = scalar_select %p171, %s168, 3
        %s173 = smul.addr %s170, 4
        %s174 = sadd.s32 %s172, %s173
        %s175 = smul.addr %s174, 8
        %s176 = scalar_lea.vmem %s0, %s175
        %s177 = smul.u32 2, %s17
      $region20: #{moe_masked_lora_attention_forward.10} parent=15 // pred_fallthru
        _
      // Predicated region
      $region21: #{moe_masked_lora_attention_forward.10} parent=15 // pred_check
        %p178 = pneg %p80
      $region22: #{moe_masked_lora_attention_forward.10} parent=15 // pred_check_branch
        %180 = sbr.rel (%p178) target = $region24
      $region23: #{moe_masked_lora_attention_forward.10} parent=15 // pred_region
        %s181 = smul.u32 2, %s17
        %p182 = scmp.lt.s32.totalorder %s18, 1
        %s183 = scalar_select %p182, %s18, 1
        %p184 = scmp.lt.s32.totalorder %s16, 1
        %s185 = scalar_select %p184, %s16, 1
        %p186 = scmp.lt.s32.totalorder %s181, 3
        %s187 = scalar_select %p186, %s181, 3
        %s188 = smul.addr %s185, 4
        %s189 = sadd.s32 %s187, %s188
        %s190 = smul.addr %s183, 8
        %s191 = sadd.s32 %s189, %s190
        %s192 = smul.addr %s191, 8
        %s193 = scalar_lea.vmem %s1, %s192
        %s194 = smul.u32 2, %s17
      $region24: #{moe_masked_lora_attention_forward.10} parent=15 // pred_fallthru
        _
      // Predicated region
      $region25: #{moe_masked_lora_attention_forward.10} parent=15 // pred_check
        %p195 = pneg %p110
      $region26: #{moe_masked_lora_attention_forward.10} parent=15 // pred_check_branch
        %197 = sbr.rel (%p195) target = $region28
      $region27: #{moe_masked_lora_attention_forward.10} parent=15 // pred_region
        %s198 = smul.u32 2, %s17
        %p199 = scmp.lt.s32.totalorder %s18, 1
        %s200 = scalar_select %p199, %s18, 1
        %p201 = scmp.lt.s32.totalorder %s16, 1
        %s202 = scalar_select %p201, %s16, 1
        %p203 = scmp.lt.s32.totalorder %s198, 3
        %s204 = scalar_select %p203, %s198, 3
        %s205 = smul.addr %s202, 4
        %s206 = sadd.s32 %s204, %s205
        %s207 = smul.addr %s200, 8
        %s208 = sadd.s32 %s206, %s207
        %s209 = smul.addr %s208, 8
        %s210 = scalar_lea.vmem %s2, %s209
        %s211 = smul.u32 2, %s17
      $region28: #{moe_masked_lora_attention_forward.10} parent=15 // pred_fallthru
        _
    $region16: #{moe_masked_lora_attention_forward.10} parent=5 // pred_fallthru
      _
    %p212 = scmp.le.s32.totalorder 1, %s9
    %p213 = scmp.lt.s32.totalorder %s9, 9
    %p214 = pnand %p212, %p213
    %p215 = pneg %p214
    // Predicated region
    $region29: #{moe_masked_lora_attention_forward.10} parent=5 // pred_check
      _
    $region30: #{moe_masked_lora_attention_forward.10} parent=5 // pred_check_branch
      %217 = sbr.rel (%p214) target = $region32
    $region31: #{moe_masked_lora_attention_forward.10} parent=5 // pred_region
      %s218 = ssub.s32 %s9, 1
      %s219 = smul.u32 2, %s20
      %p220 = scmp.lt.s32.totalorder %s19, 1
      %s221 = scalar_select %p220, %s19, 1
      %p222 = scmp.lt.s32.totalorder %s219, 3
      %s223 = scalar_select %p222, %s219, 3
      %s224 = smul.addr %s221, 4
      %s225 = sadd.s32 %s223, %s224
      %s226 = smul.addr %s225, 8
      %s227 = scalar_lea.vmem %s0, %s226
      %p228 = pneg %p56
      %p229 = pneg %p53
      %s230 = smul.u32 2, %s20
      %p231 = scmp.lt.s32.totalorder %s21, 1
      %s232 = scalar_select %p231, %s21, 1
      %p233 = scmp.lt.s32.totalorder %s19, 1
      %s234 = scalar_select %p233, %s19, 1
      %p235 = scmp.lt.s32.totalorder %s230, 3
      %s236 = scalar_select %p235, %s230, 3
      %s237 = smul.addr %s234, 4
      %s238 = sadd.s32 %s236, %s237
      %s239 = smul.addr %s232, 8
      %s240 = sadd.s32 %s238, %s239
      %s241 = smul.addr %s240, 8
      %s242 = scalar_lea.vmem %s1, %s241
      %p243 = pneg %p86
      %p244 = pneg %p83
      %s245 = smul.u32 2, %s20
      %p246 = scmp.lt.s32.totalorder %s21, 1
      %s247 = scalar_select %p246, %s21, 1
      %p248 = scmp.lt.s32.totalorder %s19, 1
      %s249 = scalar_select %p248, %s19, 1
      %p250 = scmp.lt.s32.totalorder %s245, 3
      %s251 = scalar_select %p250, %s245, 3
      %s252 = smul.addr %s249, 4
      %s253 = sadd.s32 %s251, %s252
      %s254 = smul.addr %s247, 8
      %s255 = sadd.s32 %s253, %s254
      %s256 = smul.addr %s255, 8
      %s257 = scalar_lea.vmem %s2, %s256
      %p258 = pneg %p116
      %p259 = pneg %p113
      %p260 = pneg %p146
      %p261 = pneg %p143
      %s262 = smul.u32 2, %s20
      %p263 = scmp.lt.s32.totalorder %s21, 1
      %s264 = scalar_select %p263, %s21, 1
      %p265 = scmp.lt.s32.totalorder %s19, 1
      %s266 = scalar_select %p265, %s19, 1
      %p267 = scmp.lt.s32.totalorder %s262, 3
      %s268 = scalar_select %p267, %s262, 3
      %s269 = smul.addr %s266, 4
      %s270 = sadd.s32 %s268, %s269
      %s271 = smul.addr %s264, 8
      %s272 = sadd.s32 %s270, %s271
      %s273 = smul.addr %s272, 8
      %s274 = scalar_lea.vmem %s3, %s273
      %s275 = smul.u32 2, %s20
      %p276 = scmp.lt.s32.totalorder %s19, 1
      %s277 = scalar_select %p276, %s19, 1
      %p278 = scmp.lt.s32.totalorder %s275, 3
      %s279 = scalar_select %p278, %s275, 3
      %s280 = smul.addr %s277, 4
      %s281 = sadd.s32 %s279, %s280
      %s282 = smul.addr %s281, 8
      %s283 = scalar_lea.vmem %s0, %s282
      %s284 = smul.u32 2, %s20
      %s285 = smul.u32 2, %s20
      %p286 = scmp.lt.s32.totalorder %s21, 1
      %s287 = scalar_select %p286, %s21, 1
      %p288 = scmp.lt.s32.totalorder %s19, 1
      %s289 = scalar_select %p288, %s19, 1
      %p290 = scmp.lt.s32.totalorder %s285, 3
      %s291 = scalar_select %p290, %s285, 3
      %s292 = smul.addr %s289, 4
      %s293 = sadd.s32 %s291, %s292
      %s294 = smul.addr %s287, 8
      %s295 = sadd.s32 %s293, %s294
      %s296 = smul.addr %s295, 8
      %s297 = scalar_lea.vmem %s1, %s296
      %s298 = smul.u32 2, %s20
      %s299 = smul.u32 2, %s20
      %p300 = scmp.lt.s32.totalorder %s21, 1
      %s301 = scalar_select %p300, %s21, 1
      %p302 = scmp.lt.s32.totalorder %s19, 1
      %s303 = scalar_select %p302, %s19, 1
      %p304 = scmp.lt.s32.totalorder %s299, 3
      %s305 = scalar_select %p304, %s299, 3
      %s306 = smul.addr %s303, 4
      %s307 = sadd.s32 %s305, %s306
      %s308 = smul.addr %s301, 8
      %s309 = sadd.s32 %s307, %s308
      %s310 = smul.addr %s309, 8
      %s311 = scalar_lea.vmem %s2, %s310
      %s312 = smul.u32 2, %s20
      %s313 = smul.u32 2, %s20
      %p314 = scmp.lt.s32.totalorder %s21, 1
      %s315 = scalar_select %p314, %s21, 1
      %p316 = scmp.lt.s32.totalorder %s19, 1
      %s317 = scalar_select %p316, %s19, 1
      %p318 = scmp.lt.s32.totalorder %s313, 3
      %s319 = scalar_select %p318, %s313, 3
      %s320 = smul.addr %s317, 4
      %s321 = sadd.s32 %s319, %s320
      %s322 = smul.addr %s315, 8
      %s323 = sadd.s32 %s321, %s322
      %s324 = smul.addr %s323, 8
      %s325 = scalar_lea.vmem %s3, %s324
      %s326 = smul.u32 2, %s20
      %v327 = vld [vmem:[%s283] sm:$0xff]
      %v328 = vld [vmem:[%s283 + $0x8] sm:$0xff]
      %v329 = vld [vmem:[%s297] sm:$0xff]
      %v330 = vld [vmem:[%s297 + $0x8] sm:$0xff]
      %v331 = vld [vmem:[%s311] sm:$0xff]
      %v332 = vld [vmem:[%s311 + $0x8] sm:$0xff]
      %vm333 = vcmask 64512
      %v335 = vsel %vm333, %v327, 0
      %v338 = vsel %vm333, %v329, 0
      %340 = vmatpush.xpose.msra.mxu0 0.0
      %341 = vmatpush.xpose.msra.mxu0 0.0
      %342 = vmatpush.xpose.msra.mxu0 0.0
      %343 = vmatpush.xpose.msra.mxu0 0.0
      %344 = vmatpush.xpose.msra.mxu0 0.0
      %345 = vmatpush.xpose.msra.mxu0 0.0
      %346 = vmatpush.xpose.msra.mxu0 0.0
      %347 = vmatpush.xpose.msra.mxu0 0.0
      %348 = vmatpush.xpose.msra.mxu0 0.0
      %349 = vmatpush.xpose.msra.mxu0 0.0
      %350 = vmatpush.xpose.msra.mxu0 0.0
      %351 = vmatpush.xpose.msra.mxu0 0.0
      %352 = vmatpush.xpose.msra.mxu0 0.0
      %353 = vmatpush.xpose.msra.mxu0 0.0
      %354 = vmatpush.xpose.msra.mxu0 0.0
      %355 = vmatpush.xpose.msra.mxu0 %v338
      %356 = vmatmul.f32.gmra.mxu0 %v335
      %v357 = vpop.f32.mrf.mxu0
      %v358 = vadd.f32 0.0, %v357
      %359 = vdwg.mxu0
      %v361 = vsel %vm333, %v328, 0
      %v364 = vsel %vm333, %v330, 0
      %366 = vmatpush.xpose.msra.mxu0 0.0
      %367 = vmatpush.xpose.msra.mxu0 0.0
      %368 = vmatpush.xpose.msra.mxu0 0.0
      %369 = vmatpush.xpose.msra.mxu0 0.0
      %370 = vmatpush.xpose.msra.mxu0 0.0
      %371 = vmatpush.xpose.msra.mxu0 0.0
      %372 = vmatpush.xpose.msra.mxu0 0.0
      %373 = vmatpush.xpose.msra.mxu0 0.0
      %374 = vmatpush.xpose.msra.mxu0 0.0
      %375 = vmatpush.xpose.msra.mxu0 0.0
      %376 = vmatpush.xpose.msra.mxu0 0.0
      %377 = vmatpush.xpose.msra.mxu0 0.0
      %378 = vmatpush.xpose.msra.mxu0 0.0
      %379 = vmatpush.xpose.msra.mxu0 0.0
      %380 = vmatpush.xpose.msra.mxu0 0.0
      %381 = vmatpush.xpose.msra.mxu0 %v364
      %382 = vmatmul.f32.gmra.mxu0 %v361
      %v383 = vpop.f32.mrf.mxu0
      %v384 = vadd.f32 0.0, %v383
      %385 = vdwg.mxu0
      %v386 = vmul.f32 %v358, 0.35355338
      %v387 = vmul.f32 %v384, 0.35355338
      %v388 = vsel %vm333, %v386, -inf
      %389 = vmax.xlane.f32.xlu0 %v388
      %v390 = vpop.xlane.xlu0 %389
      %v391 = vsel %vm333, %v387, -inf
      %392 = vmax.xlane.f32.xlu0 %v391
      %v393 = vpop.xlane.xlu0 %392
      %v394 = vsub.f32 %v386, %v390
      %v395 = vsub.f32 %v387, %v393
      %v396 = vmul.f32 %v394, 1.442695
      %v397 = vpow.pop %v396
      %v398 = vmul.f32 %v395, 1.442695
      %v399 = vpow.pop %v398
      %v400 = vsel %vm333, %v397, 0.0
      %401 = vadd.xlane.f32.xlu0 %v400
      %v402 = vpop.xlane.xlu0 %401
      %v403 = vsel %vm333, %v399, 0.0
      %404 = vadd.xlane.f32.xlu0 %v403
      %v405 = vpop.xlane.xlu0 %404
      %v407 = vsel %vm333, %v397, 0
      %409 = vmatpush.msra.mxu0 0.0
      %410 = vmatpush.msra.mxu0 0.0
      %411 = vmatpush.msra.mxu0 0.0
      %412 = vmatpush.msra.mxu0 0.0
      %413 = vmatpush.msra.mxu0 0.0
      %414 = vmatpush.msra.mxu0 0.0
      %415 = vmatpush.msra.mxu0 0.0
      %416 = vmatpush.msra.mxu0 0.0
      %417 = vmatpush.msra.mxu0 0.0
      %418 = vmatpush.msra.mxu0 0.0
      %419 = vmatpush.msra.mxu0 0.0
      %420 = vmatpush.msra.mxu0 0.0
      %421 = vmatpush.msra.mxu0 0.0
      %422 = vmatpush.msra.mxu0 0.0
      %423 = vmatpush.msra.mxu0 0.0
      %424 = vmatpush.msra.mxu0 %v331
      %425 = vmatmul.f32.gmra.mxu0 %v407
      %v426 = vpop.f32.mrf.mxu0
      %v427 = vadd.f32 0.0, %v426
      %428 = vdwg.mxu0
      %v430 = vsel %vm333, %v399, 0
      %432 = vmatpush.msra.mxu0 0.0
      %433 = vmatpush.msra.mxu0 0.0
      %434 = vmatpush.msra.mxu0 0.0
      %435 = vmatpush.msra.mxu0 0.0
      %436 = vmatpush.msra.mxu0 0.0
      %437 = vmatpush.msra.mxu0 0.0
      %438 = vmatpush.msra.mxu0 0.0
      %439 = vmatpush.msra.mxu0 0.0
      %440 = vmatpush.msra.mxu0 0.0
      %441 = vmatpush.msra.mxu0 0.0
      %442 = vmatpush.msra.mxu0 0.0
      %443 = vmatpush.msra.mxu0 0.0
      %444 = vmatpush.msra.mxu0 0.0
      %445 = vmatpush.msra.mxu0 0.0
      %446 = vmatpush.msra.mxu0 0.0
      %447 = vmatpush.msra.mxu0 %v332
      %448 = vmatmul.f32.gmra.mxu0 %v430
      %v449 = vpop.f32.mrf.mxu0
      %v450 = vadd.f32 0.0, %v449
      %451 = vdwg.mxu0
      %v452 = vrcp.pop %v402
      %v453 = vmul.f32 %v402, %v452
      %v454 = vsub.f32 1.0, %v453
      %v455 = vmul.f32 %v452, %v454
      %v456 = vadd.f32 %v452, %v455
      %vm457 = vweird.f32 %v402
      %vm458 = vweird.f32 %v452
      %vm459 = vmor %vm457, %vm458
      %v460 = vsel %vm459, %v452, %v456
      %v461 = vand.u32 2147483647, %v402
      %vm462 = vcmp.eq.f32.partialorder %v461, 8.507059e+37
      %v463 = vand.u32 %v402, 2147483648
      %v464 = vor.u32 1.1754944e-38, %v463
      %v465 = vsel %vm462, %v464, %v460
      %v466 = vrcp.pop %v405
      %v467 = vmul.f32 %v405, %v466
      %v468 = vsub.f32 1.0, %v467
      %v469 = vmul.f32 %v466, %v468
      %v470 = vadd.f32 %v466, %v469
      %vm471 = vweird.f32 %v405
      %vm472 = vweird.f32 %v466
      %vm473 = vmor %vm471, %vm472
      %v474 = vsel %vm473, %v466, %v470
      %v475 = vand.u32 2147483647, %v405
      %vm476 = vcmp.eq.f32.partialorder %v475, 8.507059e+37
      %v477 = vand.u32 %v405, 2147483648
      %v478 = vor.u32 1.1754944e-38, %v477
      %v479 = vsel %vm476, %v478, %v474
      %v480 = vmul.f32 %v427, %v465
      %v481 = vmul.f32 %v450, %v479
      %482 = vst.msk [vmem:[%s325] sm:$0xff] %vm333, %v480
      %483 = vst.msk [vmem:[%s325 + $0x8] sm:$0xff] %vm333, %v481
      %s484 = smul.u32 2, %s20
      %p485 = scmp.lt.s32.totalorder %s21, 1
      %s486 = scalar_select %p485, %s21, 1
      %p487 = scmp.lt.s32.totalorder %s19, 1
      %s488 = scalar_select %p487, %s19, 1
      %p489 = scmp.lt.s32.totalorder %s484, 3
      %s490 = scalar_select %p489, %s484, 3
      %s491 = smul.addr %s488, 4
      %s492 = sadd.s32 %s490, %s491
      %s493 = smul.addr %s486, 8
      %s494 = sadd.s32 %s492, %s493
      %s495 = smul.addr %s494, 8
      %s496 = scalar_lea.vmem %s3, %s495
      // Predicated region
      $region33: #{moe_masked_lora_attention_forward.10} parent=31 // pred_check
        %p497 = pneg %p143
      $region34: #{moe_masked_lora_attention_forward.10} parent=31 // pred_check_branch
        %499 = sbr.rel (%p497) target = $region36
      $region35: #{moe_masked_lora_attention_forward.10} parent=31 // pred_region
        %s500 = smul.u32 2, %s20
      $region36: #{moe_masked_lora_attention_forward.10} parent=31 // pred_fallthru
        _
    $region32: #{moe_masked_lora_attention_forward.10} parent=5 // pred_fallthru
      _
    %p501 = scmp.le.s32.totalorder 2, %s9
    // Predicated region
    $region37: #{moe_masked_lora_attention_forward.10} parent=5 // pred_check
      %p502 = pneg %p501
    $region38: #{moe_masked_lora_attention_forward.10} parent=5 // pred_check_branch
      %504 = sbr.rel (%p502) target = $region40
    $region39: #{moe_masked_lora_attention_forward.10} parent=5 // pred_region
      %s505 = ssub.s32 %s9, 2
      // Predicated region
      $region41: #{moe_masked_lora_attention_forward.10} parent=39 // pred_check
        %p506 = pneg %p149
      $region42: #{moe_masked_lora_attention_forward.10} parent=39 // pred_check_branch
        %508 = sbr.rel (%p506) target = $region44
      $region43: #{moe_masked_lora_attention_forward.10} parent=39 // pred_region
        %s509 = smul.u32 2, %s23
        %p510 = scmp.lt.s32.totalorder %s24, 1
        %s511 = scalar_select %p510, %s24, 1
        %p512 = scmp.lt.s32.totalorder %s22, 1
        %s513 = scalar_select %p512, %s22, 1
        %p514 = scmp.lt.s32.totalorder %s509, 3
        %s515 = scalar_select %p514, %s509, 3
        %s516 = smul.addr %s513, 4
        %s517 = sadd.s32 %s515, %s516
        %s518 = smul.addr %s511, 8
        %s519 = sadd.s32 %s517, %s518
        %s520 = smul.addr %s519, 8
        %s521 = scalar_lea.vmem %s3, %s520
      $region44: #{moe_masked_lora_attention_forward.10} parent=39 // pred_fallthru
        _
    $region40: #{moe_masked_lora_attention_forward.10} parent=5 // pred_fallthru
      _
  $region6: #{moe_masked_lora_attention_forward.10} parent=0 // loop_footer
    %s13 = sadd.s32 1, %s9
  $region7: #{moe_masked_lora_attention_forward.10} parent=0 // loop_footer_branch
    %8 = sbr.rel target = $region3
  $region8: #{moe_masked_lora_attention_forward.10} parent=0 // loop_exit
    _

// kernel: moe_masked_lora_attention_forward.11
$region0: #{moe_masked_lora_attention_forward.11}
  #allocation0 [shape = 'u32[]', space=smem, size = 0x4, offset = 0x4, fixed_abs, tag = 'smem constant byte address 0x4 - core index']
  #allocation1 [shape = 'u32[72,128]{1,0:T(1,128)}', space=vmem, size = 0x9000, scoped, tag = 'internal scratch']
  #allocation2 [shape = 'f32[32,32]{1,0:T(8,128)}', space=vmem, size = 0x4000, scoped, tag = 'scratch operand']
  %s0 = inlined_call_operand.vmem [shape: f32[32,32], index: 0, kind: input, shape index: {}]
  %s1 = inlined_call_operand.vmem [shape: f32[32,32], index: 1, kind: input, shape index: {}]
  %s2 = inlined_call_operand.vmem [shape: f32[1,32], index: 2, kind: input, shape index: {}]
  %s3 = inlined_call_operand.vmem [shape: f32[32,32], index: 3, kind: output, shape index: {}]
  %s4 = sld [smem:[#allocation0]]
  $region30: #{moe_masked_lora_attention_forward.11} parent=0
    _
  %s6 = ssub.s32 1, %s4
  %s7 = scalar_select 0, %s6, %s4
  // Predicated region
  $region2: #{moe_masked_lora_attention_forward.11} parent=0 // pred_check
    _
  $region3: #{moe_masked_lora_attention_forward.11} parent=0 // pred_check_branch
    %9 = sbr.rel (0) target = $region5
  $region4: #{moe_masked_lora_attention_forward.11} parent=0 // pred_region
    _
  $region5: #{moe_masked_lora_attention_forward.11} parent=0 // pred_fallthru
    _
  // Predicated region
  $region6: #{moe_masked_lora_attention_forward.11} parent=0 // pred_check
    _
  $region7: #{moe_masked_lora_attention_forward.11} parent=0 // pred_check_branch
    %11 = sbr.rel (0) target = $region9
  $region8: #{moe_masked_lora_attention_forward.11} parent=0 // pred_region
    _
  $region9: #{moe_masked_lora_attention_forward.11} parent=0 // pred_fallthru
    _
  // Predicated region
  $region10: #{moe_masked_lora_attention_forward.11} parent=0 // pred_check
    _
  $region11: #{moe_masked_lora_attention_forward.11} parent=0 // pred_check_branch
    %13 = sbr.rel (0) target = $region13
  $region12: #{moe_masked_lora_attention_forward.11} parent=0 // pred_region
    _
  $region13: #{moe_masked_lora_attention_forward.11} parent=0 // pred_fallthru
    _
  %p14 = scmp.eq.s32.totalorder 0, 0
  // Predicated region
  $region14: #{moe_masked_lora_attention_forward.11} parent=0 // pred_check
    %p15 = pneg %p14
  $region15: #{moe_masked_lora_attention_forward.11} parent=0 // pred_check_branch
    %17 = sbr.rel (%p15) target = $region17
  $region16: #{moe_masked_lora_attention_forward.11} parent=0 // pred_region
    %vm18 = vcmask 261120
    %19 = vst.msk [vmem:[#allocation2] sm:$0xff] %vm18, 0.0
    %20 = vst.msk [vmem:[#allocation2 + $0x8] sm:$0xff] %vm18, 0.0
    %21 = vst.msk [vmem:[#allocation2 + $0x10] sm:$0xff] %vm18, 0.0
    %22 = vst.msk [vmem:[#allocation2 + $0x18] sm:$0xff] %vm18, 0.0
  $region17: #{moe_masked_lora_attention_forward.11} parent=0 // pred_fallthru
    _
  %v23 = vld [vmem:[#allocation2] sm:$0xff]
  %v24 = vld [vmem:[#allocation2 + $0x8] sm:$0xff]
  %v25 = vld [vmem:[#allocation2 + $0x10] sm:$0xff]
  %v26 = vld [vmem:[#allocation2 + $0x18] sm:$0xff]
  %v27 = vld [vmem:[%s0] sm:$0xff]
  %v28 = vld [vmem:[%s0 + $0x8] sm:$0xff]
  %v29 = vld [vmem:[%s0 + $0x10] sm:$0xff]
  %v30 = vld [vmem:[%s0 + $0x18] sm:$0xff]
  %v31 = vld [vmem:[%s1] sm:$0xff]
  %v32 = vld [vmem:[%s1 + $0x8] sm:$0xff]
  %v33 = vld [vmem:[%s1 + $0x10] sm:$0xff]
  %v34 = vld [vmem:[%s1 + $0x18] sm:$0xff]
  %vm35 = vcmask 261120
  %v37 = vsel %vm35, %v27, 0
  %v40 = vsel %vm35, %v28, 0
  %v43 = vsel %vm35, %v29, 0
  %v46 = vsel %vm35, %v30, 0
  %48 = vmatpush.msra.mxu0 0.0
  %49 = vmatpush.msra.mxu0 0.0
  %50 = vmatpush.msra.mxu0 0.0
  %51 = vmatpush.msra.mxu0 0.0
  %52 = vmatpush.msra.mxu0 0.0
  %53 = vmatpush.msra.mxu0 0.0
  %54 = vmatpush.msra.mxu0 0.0
  %55 = vmatpush.msra.mxu0 0.0
  %56 = vmatpush.msra.mxu0 0.0
  %57 = vmatpush.msra.mxu0 0.0
  %58 = vmatpush.msra.mxu0 0.0
  %59 = vmatpush.msra.mxu0 0.0
  %60 = vmatpush.msra.mxu0 %v34
  %61 = vmatpush.msra.mxu0 %v33
  %62 = vmatpush.msra.mxu0 %v32
  %63 = vmatpush.msra.mxu0 %v31
  %64 = vmatmul.f32.gmra.mxu0 %v37
  %v65 = vpop.f32.mrf.mxu0
  %v66 = vadd.f32 0.0, %v65
  %67 = vmatmul.f32.gmra.mxu0 %v40
  %v68 = vpop.f32.mrf.mxu0
  %v69 = vadd.f32 0.0, %v68
  %70 = vmatmul.f32.gmra.mxu0 %v43
  %v71 = vpop.f32.mrf.mxu0
  %v72 = vadd.f32 0.0, %v71
  %73 = vmatmul.f32.gmra.mxu0 %v46
  %v74 = vpop.f32.mrf.mxu0
  %v75 = vadd.f32 0.0, %v74
  %76 = vdwg.mxu0
  %v77 = vadd.f32 %v23, %v66
  %v78 = vadd.f32 %v24, %v69
  %v79 = vadd.f32 %v25, %v72
  %v80 = vadd.f32 %v26, %v75
  %81 = vst.msk [vmem:[#allocation2] sm:$0xff] %vm35, %v77
  %82 = vst.msk [vmem:[#allocation2 + $0x8] sm:$0xff] %vm35, %v78
  %83 = vst.msk [vmem:[#allocation2 + $0x10] sm:$0xff] %vm35, %v79
  %84 = vst.msk [vmem:[#allocation2 + $0x18] sm:$0xff] %vm35, %v80
  // Predicated region
  $region18: #{moe_masked_lora_attention_forward.11} parent=0 // pred_check
    %p85 = pneg %p14
  $region19: #{moe_masked_lora_attention_forward.11} parent=0 // pred_check_branch
    %87 = sbr.rel (%p85) target = $region21
  $region20: #{moe_masked_lora_attention_forward.11} parent=0 // pred_region
    %v88 = vld [vmem:[#allocation2] sm:$0xff]
    %v89 = vld [vmem:[#allocation2 + $0x8] sm:$0xff]
    %v90 = vld [vmem:[#allocation2 + $0x10] sm:$0xff]
    %v91 = vld [vmem:[#allocation2 + $0x18] sm:$0xff]
    %v92 = vld [vmem:[%s2] sm:$0x1]
    %v94 = vperm.slane %v92, 0
    %v96 = vadd.f32 %v88, %v94
    %v97 = vadd.f32 %v89, %v94
    %v98 = vadd.f32 %v90, %v94
    %v99 = vadd.f32 %v91, %v94
    %100 = vst.msk [vmem:[%s3] sm:$0xff] %vm35, %v96
    %101 = vst.msk [vmem:[%s3 + $0x8] sm:$0xff] %vm35, %v97
    %102 = vst.msk [vmem:[%s3 + $0x10] sm:$0xff] %vm35, %v98
    %103 = vst.msk [vmem:[%s3 + $0x18] sm:$0xff] %vm35, %v99
  $region21: #{moe_masked_lora_attention_forward.11} parent=0 // pred_fallthru
    _
  // Predicated region
  $region22: #{moe_masked_lora_attention_forward.11} parent=0 // pred_check
    _
  $region23: #{moe_masked_lora_attention_forward.11} parent=0 // pred_check_branch
    %105 = sbr.rel (0) target = $region25
  $region24: #{moe_masked_lora_attention_forward.11} parent=0 // pred_region
    _
  $region25: #{moe_masked_lora_attention_forward.11} parent=0 // pred_fallthru
    _
  // Predicated region
  $region26: #{moe_masked_lora_attention_forward.11} parent=0 // pred_check
    _
  $region27: #{moe_masked_lora_attention_forward.11} parent=0 // pred_check_branch
    %107 = sbr.rel (0) target = $region29
  $region28: #{moe_masked_lora_attention_forward.11} parent=0 // pred_region
    _
  $region29: #{moe_masked_lora_attention_forward.11} parent=0 // pred_fallthru
    _

</llo_original>
